<compile_context>
chip_gen: v7x
topology: tpu7x:2x2x1
jax: 0.10.0
libtpu: 0.0.40
codegen_flags: <defaults>
</compile_context>

<pallas_src>
import functools

import numpy as np
import jax
import jax.numpy as jnp
from jax.experimental import pallas as pl
from jax.experimental.pallas import tpu as pltpu

EPS = 1e-5
LANE = 128


def _round_up(x, m):
    return ((x + m - 1) // m) * m


# ----------------------------------------------------------------------------
# Pallas kernels
# ----------------------------------------------------------------------------
def _conv1_stats_kernel(x_ref, w_ref, y_ref, stats_ref, stk_ref, *, wp, lc, cin):
    # Stack the 9 shifted tap windows (sliced straight from the input Ref) into
    # one (9*C_in, lc) bf16 operand, then a single MXU matmul with K = 9*C_in.
    for k in range(9):
        off = (k // 3) * wp + (k % 3)
        stk_ref[k * cin:(k + 1) * cin, :] = x_ref[:, off:off + lc]
    y = jnp.dot(w_ref[...], stk_ref[...], preferred_element_type=jnp.float32)
    yb = y.astype(jnp.bfloat16)
    y_ref[...] = yb                                   # bf16 inter-stage store
    # Per-image BN partial stats.  No mask needed: every lane outside the valid
    # conv1-output region is exactly zero by slab construction.
    yf = yb.astype(jnp.float32)
    s1 = jnp.sum(yf, axis=1, keepdims=True)
    s2 = jnp.sum(yf * yf, axis=1, keepdims=True)
    stats_ref[0] = jnp.concatenate([s1, s2], axis=1)


def _bn_relu_conv2_stats_kernel(y1_ref, w_ref, scale_ref, shift_ref, imask_ref,
                                omask_ref, y_ref, stats_ref, pro_ref, stk_ref,
                                *, wp, lc, c1):
    # bn1 normalize + ReLU prologue in f32; imask forces conv2's zero-padding
    # ring (and the lane tail) back to exactly zero after the affine map.  The
    # result lands in a VMEM scratch so tap windows are sliced from a Ref.
    a = jnp.maximum(y1_ref[...].astype(jnp.float32) * scale_ref[...]
                    + shift_ref[...], 0.0)
    pro_ref[...] = (a * imask_ref[...]).astype(jnp.bfloat16)
    for k in range(9):
        off = (k // 3) * wp + (k % 3)
        stk_ref[k * c1:(k + 1) * c1, :] = pro_ref[:, off:off + lc]
    y = jnp.dot(w_ref[...], stk_ref[...], preferred_element_type=jnp.float32)
    yb = y.astype(jnp.bfloat16)
    y_ref[...] = yb                                   # stored unmasked (bf16)
    ym = yb.astype(jnp.float32) * omask_ref[...]      # mask only the stats path
    s1 = jnp.sum(ym, axis=1, keepdims=True)
    s2 = jnp.sum(ym * ym, axis=1, keepdims=True)
    stats_ref[0] = jnp.concatenate([s1, s2], axis=1)


def _bn_relu_pool_kernel(y2_ref, scale_ref, shift_ref, o_ref, a_ref, *, wp, lp):
    # bn2 normalize + ReLU (f32), then 2x2 window means at every flat anchor p
    # (mean of a[p], a[p+1], a[p+wp], a[p+wp+1]); the wrapper picks the
    # even-row/even-col anchors (the actual pooled grid) out of this slab.
    a_ref[...] = jnp.maximum(y2_ref[...].astype(jnp.float32) * scale_ref[...]
                             + shift_ref[...], 0.0)
    o_ref[...] = 0.25 * (a_ref[:, 0:lp] + a_ref[:, 1:1 + lp]
                         + a_ref[:, wp:wp + lp] + a_ref[:, wp + 1:wp + 1 + lp])


# ----------------------------------------------------------------------------
# Full block forward
# ----------------------------------------------------------------------------
@jax.jit
def qconv_block_pruned_forward(x_nchw, w1_oihw, w2_oihw):
    """Forward of QConvBlock_pruned with pool_type='avg', pool_size=(2, 2)."""
    N, Cin, H, W = x_nchw.shape
    C1 = w1_oihw.shape[0]
    C2 = w2_oihw.shape[0]
    f32 = jnp.float32
    bf16 = jnp.bfloat16

    # Geometry.  conv1: pad 2 -> padded grid (Hp, Wp), output (Ho, Wo).
    # conv2: pad 1 on (Ho, Wo) -> padded grid is (Hp, Wp) again, output (Ho, Wo).
    Hp, Wp = H + 4, W + 4
    Ho, Wo = H + 2, W + 2
    L = Hp * Wp                                   # flattened padded-grid size
    Hq, Wq = Ho // 2, Wo // 2                     # pooled output size
    LP = _round_up((2 * Hq - 1) * Wp, LANE)       # pool window-sum slab
    LCo = _round_up(max((Ho - 1) * Wp + Wo, LP + Wp + 1), LANE)   # y2 slab
    LC1 = _round_up(LCo + 2 * Wp + 2, LANE)       # y1 slab (= conv2 padded grid)
    LX1 = _round_up(LC1 + 2 * Wp + 2, LANE)       # x slab (room for tap shifts)
    assert LP + Wp + 1 <= LCo and LCo + 2 * Wp + 2 <= LC1
    assert LC1 >= L and LX1 >= L + Wp + 1
    cnt = float(N * Ho * Wo)                      # BatchNorm count per channel

    # Input slab: per image -> (Wp+1) zero lanes, the conv1 zero-padded image
    # flattened row-major, zeros up to LX1.  The (Wp+1)-lane lead-in makes the
    # stage-1 matmul emit its output directly in conv2's padded-grid layout
    # (value at flat q = conv1 output at (q//Wp - 1, q%Wp - 1), everything else
    # exactly zero), so stage 2 consumes y1 with no XLA re-pad/reshape glue.
    xcn = jnp.transpose(x_nchw.astype(bf16), (1, 0, 2, 3))        # (Cin,N,H,W)
    xp = jnp.pad(xcn, ((0, 0), (0, 0), (2, 2), (2, 2))).reshape(Cin, N, L)
    x1 = jnp.pad(xp, ((0, 0), (0, 0), (Wp + 1, LX1 - L - Wp - 1)))
    x1 = x1.reshape(Cin, N * LX1)

    # Static masks over the flattened grids (built host-side).
    q = np.arange(LC1)
    in_mask2 = jnp.asarray(
        ((q < L) & (q // Wp >= 1) & (q // Wp <= Ho)
         & (q % Wp >= 1) & (q % Wp <= Wo)).astype(np.float32)[None, :])
    p = np.arange(LCo)
    out_mask2 = jnp.asarray(
        ((p // Wp < Ho) & (p % Wp < Wo)).astype(np.float32)[None, :])

    def fold(w):     # (O, I, 3, 3) -> (O, 9*I) bf16, column = (dh*3+dw)*I + i
        o, i = w.shape[0], w.shape[1]
        return jnp.transpose(w, (0, 2, 3, 1)).reshape(o, 9 * i).astype(bf16)

    def bn_params(stats):
        # stats: (N, C, 2) per-image (sum, sumsq) -> affine normalize params.
        s = jnp.sum(stats[:, :, 0], axis=0)
        sq = jnp.sum(stats[:, :, 1], axis=0)
        mean = s / cnt
        var = sq / cnt - mean * mean              # biased var (training-mode BN)
        scale = jax.lax.rsqrt(var + EPS)          # gamma = 1
        return scale[:, None], (-mean * scale)[:, None]          # beta = 0

    dims_parallel = pltpu.CompilerParams(dimension_semantics=("parallel",))

    # --- stage 1: conv1 (one folded matmul) + bn1 partial stats -------------
    y1, stats1 = pl.pallas_call(
        functools.partial(_conv1_stats_kernel, wp=Wp, lc=LC1, cin=Cin),
        grid=(N,),
        in_specs=[
            pl.BlockSpec((Cin, LX1), lambda n: (0, n)),
            pl.BlockSpec((C1, 9 * Cin), lambda n: (0, 0)),
        ],
        out_specs=[
            pl.BlockSpec((C1, LC1), lambda n: (0, n)),
            pl.BlockSpec((1, C1, 2), lambda n: (n, 0, 0)),
        ],
        out_shape=[
            jax.ShapeDtypeStruct((C1, N * LC1), bf16),
            jax.ShapeDtypeStruct((N, C1, 2), f32),
        ],
        scratch_shapes=[pltpu.VMEM((9 * Cin, LC1), bf16)],
        compiler_params=dims_parallel,
    )(x1, fold(w1_oihw))
    scale1, shift1 = bn_params(stats1)

    # --- stage 2: bn1+ReLU prologue, conv2 (folded matmul), bn2 stats -------
    y2, stats2 = pl.pallas_call(
        functools.partial(_bn_relu_conv2_stats_kernel, wp=Wp, lc=LCo, c1=C1),
        grid=(N,),
        in_specs=[
            pl.BlockSpec((C1, LC1), lambda n: (0, n)),
            pl.BlockSpec((C2, 9 * C1), lambda n: (0, 0)),
            pl.BlockSpec((C1, 1), lambda n: (0, 0)),
            pl.BlockSpec((C1, 1), lambda n: (0, 0)),
            pl.BlockSpec((1, LC1), lambda n: (0, 0)),
            pl.BlockSpec((1, LCo), lambda n: (0, 0)),
        ],
        out_specs=[
            pl.BlockSpec((C2, LCo), lambda n: (0, n)),
            pl.BlockSpec((1, C2, 2), lambda n: (n, 0, 0)),
        ],
        out_shape=[
            jax.ShapeDtypeStruct((C2, N * LCo), bf16),
            jax.ShapeDtypeStruct((N, C2, 2), f32),
        ],
        scratch_shapes=[pltpu.VMEM((C1, LC1), bf16),
                        pltpu.VMEM((9 * C1, LCo), bf16)],
        compiler_params=dims_parallel,
    )(y1, fold(w2_oihw), scale1, shift1, in_mask2, out_mask2)
    scale2, shift2 = bn_params(stats2)

    # --- stage 3: bn2 + ReLU + 2x2 avg-pool window means --------------------
    y3 = pl.pallas_call(
        functools.partial(_bn_relu_pool_kernel, wp=Wp, lp=LP),
        grid=(N,),
        in_specs=[
            pl.BlockSpec((C2, LCo), lambda n: (0, n)),
            pl.BlockSpec((C2, 1), lambda n: (0, 0)),
            pl.BlockSpec((C2, 1), lambda n: (0, 0)),
        ],
        out_specs=pl.BlockSpec((C2, LP), lambda n: (0, n)),
        out_shape=jax.ShapeDtypeStruct((C2, N * LP), f32),
        scratch_shapes=[pltpu.VMEM((C2, LCo), f32)],
        compiler_params=dims_parallel,
    )(y2, scale2, shift2)

    # --- epilogue: pick the even-row/even-col pool anchors, back to NCHW ----
    y3 = y3.reshape(C2, N, LP)[:, :, :(2 * Hq - 1) * Wp]
    y3 = y3.reshape(C2, N, 2 * Hq - 1, Wp)[:, :, 0::2, 0:2 * Wq:2]
    return jnp.transpose(y3, (1, 0, 2, 3))                     # (N, C2, Hq, Wq)


# ----------------------------------------------------------------------------
# Quaternion weight construction (plain JAX)
# ----------------------------------------------------------------------------
def quaternion_weight(r, i, j, k):
    """Hamilton-product weight: components (O//4, I//4, kh, kw) -> (O, I, kh, kw)."""
    row_r = jnp.concatenate([r, -i, -j, -k], axis=1)
    row_i = jnp.concatenate([i, r, -k, j], axis=1)
    row_j = jnp.concatenate([j, k, r, -i], axis=1)
    row_k = jnp.concatenate([k, -j, i, r], axis=1)
    return jnp.concatenate([row_r, row_i, row_j, row_k], axis=0)


# ----------------------------------------------------------------------------
# Pure-XLA reference with matching precision choices (bf16 matmul operands,
# f32 accumulation, bf16-rounded inter-stage activations, f32 BatchNorm).
# ----------------------------------------------------------------------------
@jax.jit
def _ref_forward(x, w1, w2):
    def conv(x, w, pad):
        return jax.lax.conv_general_dilated(
            x.astype(jnp.bfloat16), w.astype(jnp.bfloat16), (1, 1),
            ((pad, pad), (pad, pad)),
            dimension_numbers=("NCHW", "OIHW", "NCHW"),
            preferred_element_type=jnp.float32)

    def bn_relu(x):
        mean = jnp.mean(x, axis=(0, 2, 3), keepdims=True)
        var = jnp.mean((x - mean) ** 2, axis=(0, 2, 3), keepdims=True)
        return jnp.maximum((x - mean) * jax.lax.rsqrt(var + EPS), 0.0)

    h = conv(x, w1, 2).astype(jnp.bfloat16).astype(jnp.float32)
    h = bn_relu(h)
    h = conv(h, w2, 1).astype(jnp.bfloat16).astype(jnp.float32)
    h = bn_relu(h)
    N, C, Hh, Ww = h.shape
    return h.reshape(N, C, Hh // 2, 2, Ww // 2, 2).mean(axis=(3, 5))


# ----------------------------------------------------------------------------
# Main
# ----------------------------------------------------------------------------
if __name__ == "__main__":
    # Module config (channels must be divisible by 4 for quaternion layers).
    in_channels_1, out_channels_1, out_channels_2 = 4, 8, 8
    N, H, W = 2, 16, 16

    key = jax.random.PRNGKey(0)
    kx, k1r, k1i, k1j, k1k, k2r, k2i, k2j, k2k = jax.random.split(key, 9)

    x = jax.random.normal(kx, (N, in_channels_1, H, W), dtype=jnp.float32)

    # Deterministic quaternion-component weights: (O//4, I//4, 3, 3) each.
    s1 = (out_channels_1 // 4, in_channels_1 // 4, 3, 3)
    s2 = (out_channels_2 // 4, out_channels_1 // 4, 3, 3)
    w1 = quaternion_weight(
        0.1 * jax.random.normal(k1r, s1), 0.1 * jax.random.normal(k1i, s1),
        0.1 * jax.random.normal(k1j, s1), 0.1 * jax.random.normal(k1k, s1))
    w2 = quaternion_weight(
        0.1 * jax.random.normal(k2r, s2), 0.1 * jax.random.normal(k2i, s2),
        0.1 * jax.random.normal(k2j, s2), 0.1 * jax.random.normal(k2k, s2))

    out = qconv_block_pruned_forward(x, w1, w2)
    out = jax.block_until_ready(out)

    expected_shape = (N, out_channels_2, (H + 2) // 2, (W + 2) // 2)
    assert out.shape == expected_shape, (out.shape, expected_shape)

    ref = jax.block_until_ready(_ref_forward(x, w1, w2))
    assert jnp.allclose(out, ref, rtol=3e-3, atol=3e-3), (
        float(jnp.max(jnp.abs(out - ref))))

    print("KERNEL_OK")
</pallas_src>

<mosaic_0001>
module attributes {stable_mosaic.version = 11 : i64} {
  func.func @_conv1_stats_kernel(%arg0: i32, %arg1: memref<4x768xbf16, #tpu.memory_space<vmem>>, %arg2: memref<8x36xbf16, #tpu.memory_space<vmem>>, %arg3: memref<8x640xbf16, #tpu.memory_space<vmem>>, %arg4: memref<1x8x2xf32, #tpu.memory_space<vmem>>, %arg5: memref<36x640xbf16, #tpu.memory_space<vmem>>) attributes {dimension_semantics = [#tpu.dimension_semantics<parallel>], iteration_bounds = array<i64: 2>, scalar_prefetch = 0 : i64, scratch_operands = 1 : i64, tpu.core_type = #tpu.core_type<tc>, window_params = [{transform_indices = @transform_0, window_bounds = array<i64: 4, 768>}, {pipeline_mode = #tpu.pipeline_mode<synchronous>, transform_indices = @transform_1, window_bounds = array<i64: 8, 36>}, {transform_indices = @transform_2, window_bounds = array<i64: 8, 640>}, {transform_indices = @transform_3, window_bounds = array<i64: 1, 8, 2>}]} {
    %c0 = arith.constant 0 : index
    %c0_0 = arith.constant 0 : index
    %0 = vector.load %arg1[%c0, %c0_0] : memref<4x768xbf16, #tpu.memory_space<vmem>>, vector<4x640xbf16>
    %c0_1 = arith.constant 0 : index
    %c0_2 = arith.constant 0 : index
    %1 = vector.load %arg5[%c0_1, %c0_2] : memref<36x640xbf16, #tpu.memory_space<vmem>>, vector<4x640xbf16>
    tpu.vector_store %arg5[%c0_1, %c0_2], %0 {strides = array<i32>} : memref<36x640xbf16, #tpu.memory_space<vmem>>, vector<4x640xbf16>,
    %c0_3 = arith.constant 0 : index
    %c1 = arith.constant 1 : index
    %2 = vector.load %arg1[%c0_3, %c1] : memref<4x768xbf16, #tpu.memory_space<vmem>>, vector<4x640xbf16>
    %c4 = arith.constant 4 : index
    %c0_4 = arith.constant 0 : index
    %3 = vector.load %arg5[%c4, %c0_4] : memref<36x640xbf16, #tpu.memory_space<vmem>>, vector<4x640xbf16>
    tpu.vector_store %arg5[%c4, %c0_4], %2 {strides = array<i32>} : memref<36x640xbf16, #tpu.memory_space<vmem>>, vector<4x640xbf16>,
    %c0_5 = arith.constant 0 : index
    %c2 = arith.constant 2 : index
    %4 = vector.load %arg1[%c0_5, %c2] : memref<4x768xbf16, #tpu.memory_space<vmem>>, vector<4x640xbf16>
    %c8 = arith.constant 8 : index
    %c0_6 = arith.constant 0 : index
    %5 = vector.load %arg5[%c8, %c0_6] : memref<36x640xbf16, #tpu.memory_space<vmem>>, vector<4x640xbf16>
    tpu.vector_store %arg5[%c8, %c0_6], %4 {strides = array<i32>} : memref<36x640xbf16, #tpu.memory_space<vmem>>, vector<4x640xbf16>,
    %c0_7 = arith.constant 0 : index
    %c20 = arith.constant 20 : index
    %6 = vector.load %arg1[%c0_7, %c20] : memref<4x768xbf16, #tpu.memory_space<vmem>>, vector<4x640xbf16>
    %c12 = arith.constant 12 : index
    %c0_8 = arith.constant 0 : index
    %7 = vector.load %arg5[%c12, %c0_8] : memref<36x640xbf16, #tpu.memory_space<vmem>>, vector<4x640xbf16>
    tpu.vector_store %arg5[%c12, %c0_8], %6 {strides = array<i32>} : memref<36x640xbf16, #tpu.memory_space<vmem>>, vector<4x640xbf16>,
    %c0_9 = arith.constant 0 : index
    %c21 = arith.constant 21 : index
    %8 = vector.load %arg1[%c0_9, %c21] : memref<4x768xbf16, #tpu.memory_space<vmem>>, vector<4x640xbf16>
    %c16 = arith.constant 16 : index
    %c0_10 = arith.constant 0 : index
    %9 = vector.load %arg5[%c16, %c0_10] : memref<36x640xbf16, #tpu.memory_space<vmem>>, vector<4x640xbf16>
    tpu.vector_store %arg5[%c16, %c0_10], %8 {strides = array<i32>} : memref<36x640xbf16, #tpu.memory_space<vmem>>, vector<4x640xbf16>,
    %c0_11 = arith.constant 0 : index
    %c22 = arith.constant 22 : index
    %10 = vector.load %arg1[%c0_11, %c22] : memref<4x768xbf16, #tpu.memory_space<vmem>>, vector<4x640xbf16>
    %c20_12 = arith.constant 20 : index
    %c0_13 = arith.constant 0 : index
    %11 = vector.load %arg5[%c20_12, %c0_13] : memref<36x640xbf16, #tpu.memory_space<vmem>>, vector<4x640xbf16>
    tpu.vector_store %arg5[%c20_12, %c0_13], %10 {strides = array<i32>} : memref<36x640xbf16, #tpu.memory_space<vmem>>, vector<4x640xbf16>,
    %c0_14 = arith.constant 0 : index
    %c40 = arith.constant 40 : index
    %12 = vector.load %arg1[%c0_14, %c40] : memref<4x768xbf16, #tpu.memory_space<vmem>>, vector<4x640xbf16>
    %c24 = arith.constant 24 : index
    %c0_15 = arith.constant 0 : index
    %13 = vector.load %arg5[%c24, %c0_15] : memref<36x640xbf16, #tpu.memory_space<vmem>>, vector<4x640xbf16>
    tpu.vector_store %arg5[%c24, %c0_15], %12 {strides = array<i32>} : memref<36x640xbf16, #tpu.memory_space<vmem>>, vector<4x640xbf16>,
    %c0_16 = arith.constant 0 : index
    %c41 = arith.constant 41 : index
    %14 = vector.load %arg1[%c0_16, %c41] : memref<4x768xbf16, #tpu.memory_space<vmem>>, vector<4x640xbf16>
    %c28 = arith.constant 28 : index
    %c0_17 = arith.constant 0 : index
    %15 = vector.load %arg5[%c28, %c0_17] : memref<36x640xbf16, #tpu.memory_space<vmem>>, vector<4x640xbf16>
    tpu.vector_store %arg5[%c28, %c0_17], %14 {strides = array<i32>} : memref<36x640xbf16, #tpu.memory_space<vmem>>, vector<4x640xbf16>,
    %c0_18 = arith.constant 0 : index
    %c42 = arith.constant 42 : index
    %16 = vector.load %arg1[%c0_18, %c42] : memref<4x768xbf16, #tpu.memory_space<vmem>>, vector<4x640xbf16>
    %c32 = arith.constant 32 : index
    %c0_19 = arith.constant 0 : index
    %17 = vector.load %arg5[%c32, %c0_19] : memref<36x640xbf16, #tpu.memory_space<vmem>>, vector<4x640xbf16>
    tpu.vector_store %arg5[%c32, %c0_19], %16 {strides = array<i32>} : memref<36x640xbf16, #tpu.memory_space<vmem>>, vector<4x640xbf16>,
    %c0_20 = arith.constant 0 : index
    %c0_21 = arith.constant 0 : index
    %18 = vector.load %arg2[%c0_20, %c0_21] : memref<8x36xbf16, #tpu.memory_space<vmem>>, vector<8x36xbf16>
    %c0_22 = arith.constant 0 : index
    %c0_23 = arith.constant 0 : index
    %19 = vector.load %arg5[%c0_22, %c0_23] : memref<36x640xbf16, #tpu.memory_space<vmem>>, vector<36x640xbf16>
    %cst = arith.constant dense<0.000000e+00> : vector<8x640xf32>
    %20 = tpu.matmul %18, %19, %cst {dimension_numbers = #tpu.dot_dimension_numbers<[1], [0], [0], [1], [0, 0, 1, 1], [], []>} : vector<8x36xbf16>, vector<36x640xbf16>, vector<8x640xf32> -> vector<8x640xf32>
    %21 = arith.truncf %20 : vector<8x640xf32> to vector<8x640xbf16>
    %c0_24 = arith.constant 0 : index
    %c0_25 = arith.constant 0 : index
    %22 = vector.load %arg3[%c0_24, %c0_25] : memref<8x640xbf16, #tpu.memory_space<vmem>>, vector<8x640xbf16>
    tpu.vector_store %arg3[%c0_24, %c0_25], %21 {strides = array<i32>} : memref<8x640xbf16, #tpu.memory_space<vmem>>, vector<8x640xbf16>,
    %23 = arith.extf %21 : vector<8x640xbf16> to vector<8x640xf32>
    %cst_26 = arith.constant dense<0.000000e+00> : vector<8xf32>
    %24 = vector.multi_reduction <add>, %23, %cst_26 [1] : vector<8x640xf32> to vector<8xf32>
    %25 = vector.shape_cast %24 : vector<8xf32> to vector<8x1xf32>
    %26 = arith.mulf %23, %23 : vector<8x640xf32>
    %cst_27 = arith.constant dense<0.000000e+00> : vector<8xf32>
    %27 = vector.multi_reduction <add>, %26, %cst_27 [1] : vector<8x640xf32> to vector<8xf32>
    %28 = vector.shape_cast %27 : vector<8xf32> to vector<8x1xf32>
    %29 = tpu.concatenate %25, %28 in 1 : vector<8x1xf32>, vector<8x1xf32> -> vector<8x2xf32>
    %c0_28 = arith.constant 0 : index
    %c0_29 = arith.constant 0 : index
    %c0_30 = arith.constant 0 : index
    %30 = vector.load %arg4[%c0_28, %c0_29, %c0_30] : memref<1x8x2xf32, #tpu.memory_space<vmem>>, vector<1x8x2xf32>
    %31 = vector.shape_cast %30 : vector<1x8x2xf32> to vector<8x2xf32>
    %32 = vector.shape_cast %29 : vector<8x2xf32> to vector<1x8x2xf32>
    tpu.vector_store %arg4[%c0_28, %c0_29, %c0_30], %32 {strides = array<i32>} : memref<1x8x2xf32, #tpu.memory_space<vmem>>, vector<1x8x2xf32>,
    return
  }
  func.func @transform_0(%arg0: i32) -> (i32, i32) {
    %c0_i32 = arith.constant 0 : i32
    %c0_i32_0 = arith.constant 0 : i32
    return %c0_i32, %arg0 : i32, i32
  }
  func.func @transform_1(%arg0: i32) -> (i32, i32) {
    %c0_i32 = arith.constant 0 : i32
    %c0_i32_0 = arith.constant 0 : i32
    %c0_i32_1 = arith.constant 0 : i32
    return %c0_i32, %c0_i32_0 : i32, i32
  }
  func.func @transform_2(%arg0: i32) -> (i32, i32) {
    %c0_i32 = arith.constant 0 : i32
    %c0_i32_0 = arith.constant 0 : i32
    return %c0_i32, %arg0 : i32, i32
  }
  func.func @transform_3(%arg0: i32) -> (i32, i32, i32) {
    %c0_i32 = arith.constant 0 : i32
    %c0_i32_0 = arith.constant 0 : i32
    %c0_i32_1 = arith.constant 0 : i32
    return %arg0, %c0_i32, %c0_i32_0 : i32, i32, i32
  }
}

module attributes {stable_mosaic.version = 11 : i64} {
  func.func @_bn_relu_conv2_stats_kernel(%arg0: i32, %arg1: memref<8x640xbf16, #tpu.memory_space<vmem>>, %arg2: memref<8x72xbf16, #tpu.memory_space<vmem>>, %arg3: memref<8x1xf32, #tpu.memory_space<vmem>>, %arg4: memref<8x1xf32, #tpu.memory_space<vmem>>, %arg5: memref<1x640xf32, #tpu.memory_space<vmem>>, %arg6: memref<1x512xf32, #tpu.memory_space<vmem>>, %arg7: memref<8x512xbf16, #tpu.memory_space<vmem>>, %arg8: memref<1x8x2xf32, #tpu.memory_space<vmem>>, %arg9: memref<8x640xbf16, #tpu.memory_space<vmem>>, %arg10: memref<72x512xbf16, #tpu.memory_space<vmem>>) attributes {dimension_semantics = [#tpu.dimension_semantics<parallel>], iteration_bounds = array<i64: 2>, scalar_prefetch = 0 : i64, scratch_operands = 2 : i64, tpu.core_type = #tpu.core_type<tc>, window_params = [{transform_indices = @transform_0, window_bounds = array<i64: 8, 640>}, {pipeline_mode = #tpu.pipeline_mode<synchronous>, transform_indices = @transform_1, window_bounds = array<i64: 8, 72>}, {pipeline_mode = #tpu.pipeline_mode<synchronous>, transform_indices = @transform_2, window_bounds = array<i64: 8, 1>}, {pipeline_mode = #tpu.pipeline_mode<synchronous>, transform_indices = @transform_3, window_bounds = array<i64: 8, 1>}, {pipeline_mode = #tpu.pipeline_mode<synchronous>, transform_indices = @transform_4, window_bounds = array<i64: 1, 640>}, {pipeline_mode = #tpu.pipeline_mode<synchronous>, transform_indices = @transform_5, window_bounds = array<i64: 1, 512>}, {transform_indices = @transform_6, window_bounds = array<i64: 8, 512>}, {transform_indices = @transform_7, window_bounds = array<i64: 1, 8, 2>}]} {
    %c0 = arith.constant 0 : index
    %c0_0 = arith.constant 0 : index
    %0 = vector.load %arg1[%c0, %c0_0] : memref<8x640xbf16, #tpu.memory_space<vmem>>, vector<8x640xbf16>
    %1 = arith.extf %0 : vector<8x640xbf16> to vector<8x640xf32>
    %c0_1 = arith.constant 0 : index
    %c0_2 = arith.constant 0 : index
    %2 = vector.load %arg3[%c0_1, %c0_2] : memref<8x1xf32, #tpu.memory_space<vmem>>, vector<8x1xf32>
    %3 = vector.broadcast %2 : vector<8x1xf32> to vector<8x640xf32>
    %4 = arith.mulf %1, %3 : vector<8x640xf32>
    %c0_3 = arith.constant 0 : index
    %c0_4 = arith.constant 0 : index
    %5 = vector.load %arg4[%c0_3, %c0_4] : memref<8x1xf32, #tpu.memory_space<vmem>>, vector<8x1xf32>
    %6 = vector.broadcast %5 : vector<8x1xf32> to vector<8x640xf32>
    %7 = arith.addf %4, %6 : vector<8x640xf32>
    %cst = arith.constant 0.000000e+00 : f32
    %8 = vector.broadcast %cst : f32 to vector<8x640xf32>
    %9 = arith.maximumf %7, %8 : vector<8x640xf32>
    %c0_5 = arith.constant 0 : index
    %c0_6 = arith.constant 0 : index
    %10 = vector.load %arg5[%c0_5, %c0_6] : memref<1x640xf32, #tpu.memory_space<vmem>>, vector<1x640xf32>
    %11 = vector.broadcast %10 : vector<1x640xf32> to vector<8x640xf32>
    %12 = arith.mulf %9, %11 : vector<8x640xf32>
    %13 = arith.truncf %12 : vector<8x640xf32> to vector<8x640xbf16>
    %c0_7 = arith.constant 0 : index
    %c0_8 = arith.constant 0 : index
    %14 = vector.load %arg9[%c0_7, %c0_8] : memref<8x640xbf16, #tpu.memory_space<vmem>>, vector<8x640xbf16>
    tpu.vector_store %arg9[%c0_7, %c0_8], %13 {strides = array<i32>} : memref<8x640xbf16, #tpu.memory_space<vmem>>, vector<8x640xbf16>,
    %c0_9 = arith.constant 0 : index
    %c0_10 = arith.constant 0 : index
    %15 = vector.load %arg9[%c0_9, %c0_10] : memref<8x640xbf16, #tpu.memory_space<vmem>>, vector<8x512xbf16>
    %c0_11 = arith.constant 0 : index
    %c0_12 = arith.constant 0 : index
    %16 = vector.load %arg10[%c0_11, %c0_12] : memref<72x512xbf16, #tpu.memory_space<vmem>>, vector<8x512xbf16>
    tpu.vector_store %arg10[%c0_11, %c0_12], %15 {strides = array<i32>} : memref<72x512xbf16, #tpu.memory_space<vmem>>, vector<8x512xbf16>,
    %c0_13 = arith.constant 0 : index
    %c1 = arith.constant 1 : index
    %17 = vector.load %arg9[%c0_13, %c1] : memref<8x640xbf16, #tpu.memory_space<vmem>>, vector<8x512xbf16>
    %c8 = arith.constant 8 : index
    %c0_14 = arith.constant 0 : index
    %18 = vector.load %arg10[%c8, %c0_14] : memref<72x512xbf16, #tpu.memory_space<vmem>>, vector<8x512xbf16>
    tpu.vector_store %arg10[%c8, %c0_14], %17 {strides = array<i32>} : memref<72x512xbf16, #tpu.memory_space<vmem>>, vector<8x512xbf16>,
    %c0_15 = arith.constant 0 : index
    %c2 = arith.constant 2 : index
    %19 = vector.load %arg9[%c0_15, %c2] : memref<8x640xbf16, #tpu.memory_space<vmem>>, vector<8x512xbf16>
    %c16 = arith.constant 16 : index
    %c0_16 = arith.constant 0 : index
    %20 = vector.load %arg10[%c16, %c0_16] : memref<72x512xbf16, #tpu.memory_space<vmem>>, vector<8x512xbf16>
    tpu.vector_store %arg10[%c16, %c0_16], %19 {strides = array<i32>} : memref<72x512xbf16, #tpu.memory_space<vmem>>, vector<8x512xbf16>,
    %c0_17 = arith.constant 0 : index
    %c20 = arith.constant 20 : index
    %21 = vector.load %arg9[%c0_17, %c20] : memref<8x640xbf16, #tpu.memory_space<vmem>>, vector<8x512xbf16>
    %c24 = arith.constant 24 : index
    %c0_18 = arith.constant 0 : index
    %22 = vector.load %arg10[%c24, %c0_18] : memref<72x512xbf16, #tpu.memory_space<vmem>>, vector<8x512xbf16>
    tpu.vector_store %arg10[%c24, %c0_18], %21 {strides = array<i32>} : memref<72x512xbf16, #tpu.memory_space<vmem>>, vector<8x512xbf16>,
    %c0_19 = arith.constant 0 : index
    %c21 = arith.constant 21 : index
    %23 = vector.load %arg9[%c0_19, %c21] : memref<8x640xbf16, #tpu.memory_space<vmem>>, vector<8x512xbf16>
    %c32 = arith.constant 32 : index
    %c0_20 = arith.constant 0 : index
    %24 = vector.load %arg10[%c32, %c0_20] : memref<72x512xbf16, #tpu.memory_space<vmem>>, vector<8x512xbf16>
    tpu.vector_store %arg10[%c32, %c0_20], %23 {strides = array<i32>} : memref<72x512xbf16, #tpu.memory_space<vmem>>, vector<8x512xbf16>,
    %c0_21 = arith.constant 0 : index
    %c22 = arith.constant 22 : index
    %25 = vector.load %arg9[%c0_21, %c22] : memref<8x640xbf16, #tpu.memory_space<vmem>>, vector<8x512xbf16>
    %c40 = arith.constant 40 : index
    %c0_22 = arith.constant 0 : index
    %26 = vector.load %arg10[%c40, %c0_22] : memref<72x512xbf16, #tpu.memory_space<vmem>>, vector<8x512xbf16>
    tpu.vector_store %arg10[%c40, %c0_22], %25 {strides = array<i32>} : memref<72x512xbf16, #tpu.memory_space<vmem>>, vector<8x512xbf16>,
    %c0_23 = arith.constant 0 : index
    %c40_24 = arith.constant 40 : index
    %27 = vector.load %arg9[%c0_23, %c40_24] : memref<8x640xbf16, #tpu.memory_space<vmem>>, vector<8x512xbf16>
    %c48 = arith.constant 48 : index
    %c0_25 = arith.constant 0 : index
    %28 = vector.load %arg10[%c48, %c0_25] : memref<72x512xbf16, #tpu.memory_space<vmem>>, vector<8x512xbf16>
    tpu.vector_store %arg10[%c48, %c0_25], %27 {strides = array<i32>} : memref<72x512xbf16, #tpu.memory_space<vmem>>, vector<8x512xbf16>,
    %c0_26 = arith.constant 0 : index
    %c41 = arith.constant 41 : index
    %29 = vector.load %arg9[%c0_26, %c41] : memref<8x640xbf16, #tpu.memory_space<vmem>>, vector<8x512xbf16>
    %c56 = arith.constant 56 : index
    %c0_27 = arith.constant 0 : index
    %30 = vector.load %arg10[%c56, %c0_27] : memref<72x512xbf16, #tpu.memory_space<vmem>>, vector<8x512xbf16>
    tpu.vector_store %arg10[%c56, %c0_27], %29 {strides = array<i32>} : memref<72x512xbf16, #tpu.memory_space<vmem>>, vector<8x512xbf16>,
    %c0_28 = arith.constant 0 : index
    %c42 = arith.constant 42 : index
    %31 = vector.load %arg9[%c0_28, %c42] : memref<8x640xbf16, #tpu.memory_space<vmem>>, vector<8x512xbf16>
    %c64 = arith.constant 64 : index
    %c0_29 = arith.constant 0 : index
    %32 = vector.load %arg10[%c64, %c0_29] : memref<72x512xbf16, #tpu.memory_space<vmem>>, vector<8x512xbf16>
    tpu.vector_store %arg10[%c64, %c0_29], %31 {strides = array<i32>} : memref<72x512xbf16, #tpu.memory_space<vmem>>, vector<8x512xbf16>,
    %c0_30 = arith.constant 0 : index
    %c0_31 = arith.constant 0 : index
    %33 = vector.load %arg2[%c0_30, %c0_31] : memref<8x72xbf16, #tpu.memory_space<vmem>>, vector<8x72xbf16>
    %c0_32 = arith.constant 0 : index
    %c0_33 = arith.constant 0 : index
    %34 = vector.load %arg10[%c0_32, %c0_33] : memref<72x512xbf16, #tpu.memory_space<vmem>>, vector<72x512xbf16>
    %cst_34 = arith.constant dense<0.000000e+00> : vector<8x512xf32>
    %35 = tpu.matmul %33, %34, %cst_34 {dimension_numbers = #tpu.dot_dimension_numbers<[1], [0], [0], [1], [0, 0, 1, 1], [], []>} : vector<8x72xbf16>, vector<72x512xbf16>, vector<8x512xf32> -> vector<8x512xf32>
    %36 = arith.truncf %35 : vector<8x512xf32> to vector<8x512xbf16>
    %c0_35 = arith.constant 0 : index
    %c0_36 = arith.constant 0 : index
    %37 = vector.load %arg7[%c0_35, %c0_36] : memref<8x512xbf16, #tpu.memory_space<vmem>>, vector<8x512xbf16>
    tpu.vector_store %arg7[%c0_35, %c0_36], %36 {strides = array<i32>} : memref<8x512xbf16, #tpu.memory_space<vmem>>, vector<8x512xbf16>,
    %38 = arith.extf %36 : vector<8x512xbf16> to vector<8x512xf32>
    %c0_37 = arith.constant 0 : index
    %c0_38 = arith.constant 0 : index
    %39 = vector.load %arg6[%c0_37, %c0_38] : memref<1x512xf32, #tpu.memory_space<vmem>>, vector<1x512xf32>
    %40 = vector.broadcast %39 : vector<1x512xf32> to vector<8x512xf32>
    %41 = arith.mulf %38, %40 : vector<8x512xf32>
    %cst_39 = arith.constant dense<0.000000e+00> : vector<8xf32>
    %42 = vector.multi_reduction <add>, %41, %cst_39 [1] : vector<8x512xf32> to vector<8xf32>
    %43 = vector.shape_cast %42 : vector<8xf32> to vector<8x1xf32>
    %44 = arith.mulf %41, %41 : vector<8x512xf32>
    %cst_40 = arith.constant dense<0.000000e+00> : vector<8xf32>
    %45 = vector.multi_reduction <add>, %44, %cst_40 [1] : vector<8x512xf32> to vector<8xf32>
    %46 = vector.shape_cast %45 : vector<8xf32> to vector<8x1xf32>
    %47 = tpu.concatenate %43, %46 in 1 : vector<8x1xf32>, vector<8x1xf32> -> vector<8x2xf32>
    %c0_41 = arith.constant 0 : index
    %c0_42 = arith.constant 0 : index
    %c0_43 = arith.constant 0 : index
    %48 = vector.load %arg8[%c0_41, %c0_42, %c0_43] : memref<1x8x2xf32, #tpu.memory_space<vmem>>, vector<1x8x2xf32>
    %49 = vector.shape_cast %48 : vector<1x8x2xf32> to vector<8x2xf32>
    %50 = vector.shape_cast %47 : vector<8x2xf32> to vector<1x8x2xf32>
    tpu.vector_store %arg8[%c0_41, %c0_42, %c0_43], %50 {strides = array<i32>} : memref<1x8x2xf32, #tpu.memory_space<vmem>>, vector<1x8x2xf32>,
    return
  }
  func.func @transform_0(%arg0: i32) -> (i32, i32) {
    %c0_i32 = arith.constant 0 : i32
    %c0_i32_0 = arith.constant 0 : i32
    return %c0_i32, %arg0 : i32, i32
  }
  func.func @transform_1(%arg0: i32) -> (i32, i32) {
    %c0_i32 = arith.constant 0 : i32
    %c0_i32_0 = arith.constant 0 : i32
    %c0_i32_1 = arith.constant 0 : i32
    return %c0_i32, %c0_i32_0 : i32, i32
  }
  func.func @transform_2(%arg0: i32) -> (i32, i32) {
    %c0_i32 = arith.constant 0 : i32
    %c0_i32_0 = arith.constant 0 : i32
    %c0_i32_1 = arith.constant 0 : i32
    return %c0_i32, %c0_i32_0 : i32, i32
  }
  func.func @transform_3(%arg0: i32) -> (i32, i32) {
    %c0_i32 = arith.constant 0 : i32
    %c0_i32_0 = arith.constant 0 : i32
    %c0_i32_1 = arith.constant 0 : i32
    return %c0_i32, %c0_i32_0 : i32, i32
  }
  func.func @transform_4(%arg0: i32) -> (i32, i32) {
    %c0_i32 = arith.constant 0 : i32
    %c0_i32_0 = arith.constant 0 : i32
    %c0_i32_1 = arith.constant 0 : i32
    return %c0_i32, %c0_i32_0 : i32, i32
  }
  func.func @transform_5(%arg0: i32) -> (i32, i32) {
    %c0_i32 = arith.constant 0 : i32
    %c0_i32_0 = arith.constant 0 : i32
    %c0_i32_1 = arith.constant 0 : i32
    return %c0_i32, %c0_i32_0 : i32, i32
  }
  func.func @transform_6(%arg0: i32) -> (i32, i32) {
    %c0_i32 = arith.constant 0 : i32
    %c0_i32_0 = arith.constant 0 : i32
    return %c0_i32, %arg0 : i32, i32
  }
  func.func @transform_7(%arg0: i32) -> (i32, i32, i32) {
    %c0_i32 = arith.constant 0 : i32
    %c0_i32_0 = arith.constant 0 : i32
    %c0_i32_1 = arith.constant 0 : i32
    return %arg0, %c0_i32, %c0_i32_0 : i32, i32, i32
  }
}

module attributes {stable_mosaic.version = 11 : i64} {
  func.func @_bn_relu_pool_kernel(%arg0: i32, %arg1: memref<8x512xbf16, #tpu.memory_space<vmem>>, %arg2: memref<8x1xf32, #tpu.memory_space<vmem>>, %arg3: memref<8x1xf32, #tpu.memory_space<vmem>>, %arg4: memref<8x384xf32, #tpu.memory_space<vmem>>, %arg5: memref<8x512xf32, #tpu.memory_space<vmem>>) attributes {dimension_semantics = [#tpu.dimension_semantics<parallel>], iteration_bounds = array<i64: 2>, scalar_prefetch = 0 : i64, scratch_operands = 1 : i64, tpu.core_type = #tpu.core_type<tc>, window_params = [{transform_indices = @transform_0, window_bounds = array<i64: 8, 512>}, {pipeline_mode = #tpu.pipeline_mode<synchronous>, transform_indices = @transform_1, window_bounds = array<i64: 8, 1>}, {pipeline_mode = #tpu.pipeline_mode<synchronous>, transform_indices = @transform_2, window_bounds = array<i64: 8, 1>}, {transform_indices = @transform_3, window_bounds = array<i64: 8, 384>}]} {
    %c0 = arith.constant 0 : index
    %c0_0 = arith.constant 0 : index
    %0 = vector.load %arg1[%c0, %c0_0] : memref<8x512xbf16, #tpu.memory_space<vmem>>, vector<8x512xbf16>
    %1 = arith.extf %0 : vector<8x512xbf16> to vector<8x512xf32>
    %c0_1 = arith.constant 0 : index
    %c0_2 = arith.constant 0 : index
    %2 = vector.load %arg2[%c0_1, %c0_2] : memref<8x1xf32, #tpu.memory_space<vmem>>, vector<8x1xf32>
    %3 = vector.broadcast %2 : vector<8x1xf32> to vector<8x512xf32>
    %4 = arith.mulf %1, %3 : vector<8x512xf32>
    %c0_3 = arith.constant 0 : index
    %c0_4 = arith.constant 0 : index
    %5 = vector.load %arg3[%c0_3, %c0_4] : memref<8x1xf32, #tpu.memory_space<vmem>>, vector<8x1xf32>
    %6 = vector.broadcast %5 : vector<8x1xf32> to vector<8x512xf32>
    %7 = arith.addf %4, %6 : vector<8x512xf32>
    %cst = arith.constant 0.000000e+00 : f32
    %8 = vector.broadcast %cst : f32 to vector<8x512xf32>
    %9 = arith.maximumf %7, %8 : vector<8x512xf32>
    %c0_5 = arith.constant 0 : index
    %c0_6 = arith.constant 0 : index
    %10 = vector.load %arg5[%c0_5, %c0_6] : memref<8x512xf32, #tpu.memory_space<vmem>>, vector<8x512xf32>
    tpu.vector_store %arg5[%c0_5, %c0_6], %9 {strides = array<i32>} : memref<8x512xf32, #tpu.memory_space<vmem>>, vector<8x512xf32>,
    %c0_7 = arith.constant 0 : index
    %c0_8 = arith.constant 0 : index
    %11 = vector.load %arg5[%c0_7, %c0_8] : memref<8x512xf32, #tpu.memory_space<vmem>>, vector<8x384xf32>
    %c0_9 = arith.constant 0 : index
    %c1 = arith.constant 1 : index
    %12 = vector.load %arg5[%c0_9, %c1] : memref<8x512xf32, #tpu.memory_space<vmem>>, vector<8x384xf32>
    %13 = arith.addf %11, %12 : vector<8x384xf32>
    %c0_10 = arith.constant 0 : index
    %c20 = arith.constant 20 : index
    %14 = vector.load %arg5[%c0_10, %c20] : memref<8x512xf32, #tpu.memory_space<vmem>>, vector<8x384xf32>
    %15 = arith.addf %13, %14 : vector<8x384xf32>
    %c0_11 = arith.constant 0 : index
    %c21 = arith.constant 21 : index
    %16 = vector.load %arg5[%c0_11, %c21] : memref<8x512xf32, #tpu.memory_space<vmem>>, vector<8x384xf32>
    %17 = arith.addf %15, %16 : vector<8x384xf32>
    %cst_12 = arith.constant 2.500000e-01 : f32
    %18 = vector.broadcast %cst_12 : f32 to vector<8x384xf32>
    %19 = arith.mulf %18, %17 : vector<8x384xf32>
    %c0_13 = arith.constant 0 : index
    %c0_14 = arith.constant 0 : index
    %20 = vector.load %arg4[%c0_13, %c0_14] : memref<8x384xf32, #tpu.memory_space<vmem>>, vector<8x384xf32>
    tpu.vector_store %arg4[%c0_13, %c0_14], %19 {strides = array<i32>} : memref<8x384xf32, #tpu.memory_space<vmem>>, vector<8x384xf32>,
    return
  }
  func.func @transform_0(%arg0: i32) -> (i32, i32) {
    %c0_i32 = arith.constant 0 : i32
    %c0_i32_0 = arith.constant 0 : i32
    return %c0_i32, %arg0 : i32, i32
  }
  func.func @transform_1(%arg0: i32) -> (i32, i32) {
    %c0_i32 = arith.constant 0 : i32
    %c0_i32_0 = arith.constant 0 : i32
    %c0_i32_1 = arith.constant 0 : i32
    return %c0_i32, %c0_i32_0 : i32, i32
  }
  func.func @transform_2(%arg0: i32) -> (i32, i32) {
    %c0_i32 = arith.constant 0 : i32
    %c0_i32_0 = arith.constant 0 : i32
    %c0_i32_1 = arith.constant 0 : i32
    return %c0_i32, %c0_i32_0 : i32, i32
  }
  func.func @transform_3(%arg0: i32) -> (i32, i32) {
    %c0_i32 = arith.constant 0 : i32
    %c0_i32_0 = arith.constant 0 : i32
    return %c0_i32, %arg0 : i32, i32
  }
}

</mosaic_0001>

<llo_original>
// kernel: mul.36
$region0: #{mul.36}
  #allocation0 [shape = 's32[1]{0}', space=sflag, size = 0x4, scoped, tag = 'scoped memory for mul.36']
  %s0 = inlined_call_operand.vmem [shape: f32[8,1], index: 0, kind: input, shape index: {}]
  %s1 = inlined_call_operand.vmem [shape: f32[8,1], index: 1, kind: input, shape index: {}]
  %s2 = inlined_call_operand.vmem [shape: f32[8,1], index: 2, kind: output, shape index: {}]
  %v3 = vld [vmem:[%s0] sm:$0xff]
  %v4 = vld [vmem:[%s1] sm:$0xff]
  %5 = xla_tuple %v3, %v4
  %6 = xla_tuple %5
  %v7 = vmul.f32 %v3, %v4
  %8 = xla_tuple %v7
  %9 = vst [vmem:[%s2] sm:$0xff] %v7

// kernel: qconv_block_pruned_forward.5
$region0: #{qconv_block_pruned_forward.5}
  #allocation0 [shape = 'u32[]', space=smem, size = 0x4, offset = 0x4, fixed_abs, tag = 'smem constant byte address 0x4 - core index']
  #allocation1 [shape = 'u32[144,128]{1,0:T(1,128)}', space=vmem, size = 0x12000, scoped, tag = 'internal scratch']
  #allocation2 [shape = 'f32[8,512]{1,0:T(8,128)}', space=vmem, size = 0x4000, scoped, tag = 'scratch operand']
  %s0 = inlined_call_operand.vmem [shape: bf16[8,1024], index: 0, kind: input, shape index: {}]
  %s1 = inlined_call_operand.vmem [shape: f32[8,1], index: 1, kind: input, shape index: {}]
  %s2 = inlined_call_operand.vmem [shape: f32[8,1], index: 2, kind: input, shape index: {}]
  %s3 = inlined_call_operand.vmem [shape: f32[8,768], index: 3, kind: output, shape index: {}]
  %s4 = sld [smem:[#allocation0]]
  $region45: #{qconv_block_pruned_forward.5} parent=0
    _
  %s6 = ssub.s32 1, %s4
  %s7 = scalar_select 0, %s6, %s4
  loop: start=0, step=1, limit=4
  $region2: #{qconv_block_pruned_forward.5} parent=0 // loop_pre_header
    _
  $region3: #{qconv_block_pruned_forward.5} parent=0 // loop_header
    %s9 = sphi 0, %s13
    %p10 = scmp.ge.s32.totalorder %s9, 4
    %s19 = sphi 0, %s21
    %s22 = sphi 0, %s19
    %s23 = sphi 0, %s22
    %s39 = sphi 0, %s23
    %s43 = sphi 0, %s43
    %s45 = sphi 0, %s43
    %s46 = sphi 0, %s45
    %s60 = sphi 0, %s46
    %s64 = sphi 0, %s64
    %s66 = sphi 0, %s64
    %s67 = sphi 0, %s66
    %s81 = sphi 0, %s67
    %s87 = sphi 0, %s89
    %s90 = sphi 0, %s87
    %s91 = sphi 0, %s90
    %s107 = sphi 0, %s91
  $region4: #{qconv_block_pruned_forward.5} parent=0 // loop_header_branch
    %12 = sbr.rel (%p10) target = $region8
  $region5: #{qconv_block_pruned_forward.5} parent=0 // loop_body
    %s14 = ssub.s32 %s9, 1
    %s15 = ssub.s32 %s9, 2
    %s16 = sadd.s32 %s9, 1
    %s17 = ssub.s32 %s9, %s16
    %p18 = scmp.eq.s32.totalorder %s17, 0
    %s20 = sadd.s32 %s19, 1
    %s21 = scalar_select %p18, %s19, %s20
    %p24 = pneg %p18
    %p25 = scmp.eq.s32.totalorder %s9, 1
    %p26 = por %p24, %p25
    %p27 = scmp.ne.s32.totalorder %s19, %s22
    %p28 = scmp.eq.s32.totalorder %s9, 0
    %p29 = por %p27, %p28
    %p30 = scmp.ne.s32.totalorder %s19, %s22
    %p31 = scmp.eq.s32.totalorder %s14, 1
    %p32 = por %p30, %p31
    %p33 = scmp.ne.s32.totalorder %s22, %s23
    %p34 = scmp.eq.s32.totalorder %s14, 0
    %p35 = por %p33, %p34
    %p36 = scmp.ne.s32.totalorder %s22, %s23
    %p37 = scmp.eq.s32.totalorder %s15, 1
    %p38 = por %p36, %p37
    %p40 = scmp.ne.s32.totalorder %s23, %s39
    %p41 = scmp.eq.s32.totalorder %s15, 0
    %p42 = por %p40, %p41
    %s44 = sadd.s32 %s43, 1
    %p47 = scmp.eq.s32.totalorder %s9, 1
    %p48 = scmp.ne.s32.totalorder %s43, %s45
    %p49 = scmp.eq.s32.totalorder %s9, 0
    %p50 = por %p48, %p49
    %p51 = scmp.ne.s32.totalorder %s43, %s45
    %p52 = scmp.eq.s32.totalorder %s14, 1
    %p53 = por %p51, %p52
    %p54 = scmp.ne.s32.totalorder %s45, %s46
    %p55 = scmp.eq.s32.totalorder %s14, 0
    %p56 = por %p54, %p55
    %p57 = scmp.ne.s32.totalorder %s45, %s46
    %p58 = scmp.eq.s32.totalorder %s15, 1
    %p59 = por %p57, %p58
    %p61 = scmp.ne.s32.totalorder %s46, %s60
    %p62 = scmp.eq.s32.totalorder %s15, 0
    %p63 = por %p61, %p62
    %s65 = sadd.s32 %s64, 1
    %p68 = scmp.eq.s32.totalorder %s9, 1
    %p69 = scmp.ne.s32.totalorder %s64, %s66
    %p70 = scmp.eq.s32.totalorder %s9, 0
    %p71 = por %p69, %p70
    %p72 = scmp.ne.s32.totalorder %s64, %s66
    %p73 = scmp.eq.s32.totalorder %s14, 1
    %p74 = por %p72, %p73
    %p75 = scmp.ne.s32.totalorder %s66, %s67
    %p76 = scmp.eq.s32.totalorder %s14, 0
    %p77 = por %p75, %p76
    %p78 = scmp.ne.s32.totalorder %s66, %s67
    %p79 = scmp.eq.s32.totalorder %s15, 1
    %p80 = por %p78, %p79
    %p82 = scmp.ne.s32.totalorder %s67, %s81
    %p83 = scmp.eq.s32.totalorder %s15, 0
    %p84 = por %p82, %p83
    %s85 = ssub.s32 %s9, %s16
    %p86 = scmp.eq.s32.totalorder %s85, 0
    %s88 = sadd.s32 %s87, 1
    %s89 = scalar_select %p86, %s87, %s88
    %p92 = pneg %p86
    %p93 = scmp.eq.s32.totalorder %s9, 1
    %p94 = por %p92, %p93
    %p95 = scmp.ne.s32.totalorder %s87, %s90
    %p96 = scmp.eq.s32.totalorder %s9, 0
    %p97 = por %p95, %p96
    %p98 = scmp.ne.s32.totalorder %s87, %s90
    %p99 = scmp.eq.s32.totalorder %s14, 1
    %p100 = por %p98, %p99
    %p101 = scmp.ne.s32.totalorder %s90, %s91
    %p102 = scmp.eq.s32.totalorder %s14, 0
    %p103 = por %p101, %p102
    %p104 = scmp.ne.s32.totalorder %s90, %s91
    %p105 = scmp.eq.s32.totalorder %s15, 1
    %p106 = por %p104, %p105
    %p108 = scmp.ne.s32.totalorder %s91, %s107
    %p109 = scmp.eq.s32.totalorder %s15, 0
    %p110 = por %p108, %p109
    %p111 = scmp.le.s32.totalorder 1, %s9
    %p112 = scmp.lt.s32.totalorder %s9, 3
    %p113 = pnand %p111, %p112
    %p114 = pneg %p113
    // Predicated region
    $region9: #{qconv_block_pruned_forward.5} parent=5 // pred_check
      _
    $region10: #{qconv_block_pruned_forward.5} parent=5 // pred_check_branch
      %116 = sbr.rel (%p113) target = $region12
    $region11: #{qconv_block_pruned_forward.5} parent=5 // pred_region
      %s117 = ssub.s32 %s9, 1
      // Predicated region
      $region13: #{qconv_block_pruned_forward.5} parent=11 // pred_check
        %p118 = pneg %p56
      $region14: #{qconv_block_pruned_forward.5} parent=11 // pred_check_branch
        %120 = sbr.rel (%p118) target = $region16
      $region15: #{qconv_block_pruned_forward.5} parent=11 // pred_region
        _
      $region16: #{qconv_block_pruned_forward.5} parent=11 // pred_fallthru
        _
      // Predicated region
      $region17: #{qconv_block_pruned_forward.5} parent=11 // pred_check
        %p121 = pneg %p77
      $region18: #{qconv_block_pruned_forward.5} parent=11 // pred_check_branch
        %123 = sbr.rel (%p121) target = $region20
      $region19: #{qconv_block_pruned_forward.5} parent=11 // pred_region
        _
      $region20: #{qconv_block_pruned_forward.5} parent=11 // pred_fallthru
        _
    $region12: #{qconv_block_pruned_forward.5} parent=5 // pred_fallthru
      _
    %p124 = scmp.lt.s32.totalorder %s9, 2
    // Predicated region
    $region21: #{qconv_block_pruned_forward.5} parent=5 // pred_check
      %p125 = pneg %p124
    $region22: #{qconv_block_pruned_forward.5} parent=5 // pred_check_branch
      %127 = sbr.rel (%p125) target = $region24
    $region23: #{qconv_block_pruned_forward.5} parent=5 // pred_region
      // Predicated region
      $region25: #{qconv_block_pruned_forward.5} parent=23 // pred_check
        %p128 = pneg %p29
      $region26: #{qconv_block_pruned_forward.5} parent=23 // pred_check_branch
        %130 = sbr.rel (%p128) target = $region28
      $region27: #{qconv_block_pruned_forward.5} parent=23 // pred_region
        %s131 = smul.u32 4, %s9
        %p132 = scmp.lt.s32.totalorder %s131, 7
        %s133 = scalar_select %p132, %s131, 7
        %s134 = smul.addr %s133, 4
        %s135 = scalar_lea.vmem %s0, %s134
        %s136 = smul.u32 4, %s9
      $region28: #{qconv_block_pruned_forward.5} parent=23 // pred_fallthru
        _
    $region24: #{qconv_block_pruned_forward.5} parent=5 // pred_fallthru
      _
    %p137 = scmp.le.s32.totalorder 1, %s9
    %p138 = scmp.lt.s32.totalorder %s9, 3
    %p139 = pnand %p137, %p138
    %p140 = pneg %p139
    // Predicated region
    $region29: #{qconv_block_pruned_forward.5} parent=5 // pred_check
      _
    $region30: #{qconv_block_pruned_forward.5} parent=5 // pred_check_branch
      %142 = sbr.rel (%p139) target = $region32
    $region31: #{qconv_block_pruned_forward.5} parent=5 // pred_region
      %s143 = ssub.s32 %s9, 1
      %s144 = smul.u32 4, %s14
      %p145 = scmp.lt.s32.totalorder %s144, 7
      %s146 = scalar_select %p145, %s144, 7
      %s147 = smul.addr %s146, 4
      %s148 = scalar_lea.vmem %s0, %s147
      %p149 = pneg %p35
      %p150 = pneg %p32
      %p151 = pneg %p56
      %p152 = pneg %p53
      %p153 = pneg %p77
      %p154 = pneg %p74
      %p155 = pneg %p103
      %p156 = pneg %p100
      %s157 = smul.u32 3, %s14
      %p158 = scmp.lt.s32.totalorder %s157, 5
      %s159 = scalar_select %p158, %s157, 5
      %s160 = smul.addr %s159, 8
      %s161 = scalar_lea.vmem %s3, %s160
      %s162 = smul.u32 4, %s14
      %p163 = scmp.lt.s32.totalorder %s162, 7
      %s164 = scalar_select %p163, %s162, 7
      %s165 = smul.addr %s164, 4
      %s166 = scalar_lea.vmem %s0, %s165
      %s167 = smul.u32 4, %s14
      %s168 = smul.u32 3, %s14
      %p169 = scmp.lt.s32.totalorder %s168, 5
      %s170 = scalar_select %p169, %s168, 5
      %s171 = smul.addr %s170, 8
      %s172 = scalar_lea.vmem %s3, %s171
      %s173 = smul.u32 3, %s14
      %v174 = vld [vmem:[%s166] sm:$0xff]
      %v175 = vld [vmem:[%s166 + $0x8] sm:$0xff]
      %v176 = vunpack.c.l.bf16 %v174
      %v177 = vunpack.c.h.bf16 %v174
      %v178 = vunpack.c.l.bf16 %v175
      %v179 = vunpack.c.h.bf16 %v175
      %v180 = vld [vmem:[%s1] sm:$0xff]
      %182 = vset.pattern.permute.xlu0 0
      %183 = vperm.xlu0 %182, %v180
      %v184 = vpop.permute.xlu0 %183
      %v186 = vmul.f32 %v176, %v184
      %v187 = vmul.f32 %v177, %v184
      %v188 = vmul.f32 %v178, %v184
      %v189 = vmul.f32 %v179, %v184
      %v190 = vld [vmem:[%s2] sm:$0xff]
      %192 = vset.pattern.permute.xlu0 0
      %193 = vperm.xlu0 %192, %v190
      %v194 = vpop.permute.xlu0 %193
      %v196 = vadd.f32 %v186, %v194
      %v197 = vadd.f32 %v187, %v194
      %v198 = vadd.f32 %v188, %v194
      %v199 = vadd.f32 %v189, %v194
      %v200 = vmax.f32 %v196, 0.0
      %v201 = vmax.f32 %v197, 0.0
      %v202 = vmax.f32 %v198, 0.0
      %v203 = vmax.f32 %v199, 0.0
      %204 = vst [vmem:[#allocation2] sm:$0xff] %v200
      %205 = vst [vmem:[#allocation2 + $0x8] sm:$0xff] %v201
      %206 = vst [vmem:[#allocation2 + $0x10] sm:$0xff] %v202
      %207 = vst [vmem:[#allocation2 + $0x18] sm:$0xff] %v203
      %v208 = vld [vmem:[#allocation2] sm:$0xff]
      %v209 = vld [vmem:[#allocation2 + $0x8] sm:$0xff]
      %v210 = vld [vmem:[#allocation2 + $0x10] sm:$0xff]
      %v211 = vld [vmem:[#allocation2] sm:$0xff]
      %v212 = vld [vmem:[#allocation2 + $0x8] sm:$0xff]
      %v213 = vld [vmem:[#allocation2 + $0x10] sm:$0xff]
      %v214 = vld [vmem:[#allocation2 + $0x18] sm:$0xff]
      %219 = vrot.lane.b32.xlu0 %v211, 127
      %v220 = vpop.permute.xlu0 %219
      %221 = vrot.lane.b32.xlu0 %v212, 127
      %v222 = vpop.permute.xlu0 %221
      %223 = vrot.lane.b32.xlu0 %v213, 127
      %v224 = vpop.permute.xlu0 %223
      %225 = vrot.lane.b32.xlu0 %v214, 127
      %v226 = vpop.permute.xlu0 %225
      %vm227 = vcmask 1039360
      %v228 = vsel %vm227, %v220, %v222
      %v229 = vsel %vm227, %v222, %v224
      %v230 = vsel %vm227, %v224, %v226
      %v234 = vadd.f32 %v208, %v228
      %v235 = vadd.f32 %v209, %v229
      %v236 = vadd.f32 %v210, %v230
      %237 = vrot.lane.b32.xlu0 %v211, 108
      %v238 = vpop.permute.xlu0 %237
      %239 = vrot.lane.b32.xlu0 %v212, 108
      %v240 = vpop.permute.xlu0 %239
      %241 = vrot.lane.b32.xlu0 %v213, 108
      %v242 = vpop.permute.xlu0 %241
      %243 = vrot.lane.b32.xlu0 %v214, 108
      %v244 = vpop.permute.xlu0 %243
      %vm245 = vcmask 883712
      %v246 = vsel %vm245, %v238, %v240
      %v247 = vsel %vm245, %v240, %v242
      %v248 = vsel %vm245, %v242, %v244
      %v252 = vadd.f32 %v234, %v246
      %v253 = vadd.f32 %v235, %v247
      %v254 = vadd.f32 %v236, %v248
      %255 = vrot.lane.b32.xlu0 %v211, 107
      %v256 = vpop.permute.xlu0 %255
      %257 = vrot.lane.b32.xlu0 %v212, 107
      %v258 = vpop.permute.xlu0 %257
      %259 = vrot.lane.b32.xlu0 %v213, 107
      %v260 = vpop.permute.xlu0 %259
      %261 = vrot.lane.b32.xlu0 %v214, 107
      %v262 = vpop.permute.xlu0 %261
      %vm263 = vcmask 875520
      %v264 = vsel %vm263, %v256, %v258
      %v265 = vsel %vm263, %v258, %v260
      %v266 = vsel %vm263, %v260, %v262
      %v270 = vadd.f32 %v252, %v264
      %v271 = vadd.f32 %v253, %v265
      %v272 = vadd.f32 %v254, %v266
      %v273 = vmul.f32 %v270, 0.25
      %v274 = vmul.f32 %v271, 0.25
      %v275 = vmul.f32 %v272, 0.25
      %276 = vst [vmem:[%s172] sm:$0xff] %v273
      %277 = vst [vmem:[%s172 + $0x8] sm:$0xff] %v274
      %278 = vst [vmem:[%s172 + $0x10] sm:$0xff] %v275
      %s279 = smul.u32 3, %s14
      %p280 = scmp.lt.s32.totalorder %s279, 5
      %s281 = scalar_select %p280, %s279, 5
      %s282 = smul.addr %s281, 8
      %s283 = scalar_lea.vmem %s3, %s282
      // Predicated region
      $region33: #{qconv_block_pruned_forward.5} parent=31 // pred_check
        %p284 = pneg %p100
      $region34: #{qconv_block_pruned_forward.5} parent=31 // pred_check_branch
        %286 = sbr.rel (%p284) target = $region36
      $region35: #{qconv_block_pruned_forward.5} parent=31 // pred_region
        %s287 = smul.u32 3, %s14
      $region36: #{qconv_block_pruned_forward.5} parent=31 // pred_fallthru
        _
    $region32: #{qconv_block_pruned_forward.5} parent=5 // pred_fallthru
      _
    %p288 = scmp.le.s32.totalorder 2, %s9
    // Predicated region
    $region37: #{qconv_block_pruned_forward.5} parent=5 // pred_check
      %p289 = pneg %p288
    $region38: #{qconv_block_pruned_forward.5} parent=5 // pred_check_branch
      %291 = sbr.rel (%p289) target = $region40
    $region39: #{qconv_block_pruned_forward.5} parent=5 // pred_region
      %s292 = ssub.s32 %s9, 2
      // Predicated region
      $region41: #{qconv_block_pruned_forward.5} parent=39 // pred_check
        %p293 = pneg %p106
      $region42: #{qconv_block_pruned_forward.5} parent=39 // pred_check_branch
        %295 = sbr.rel (%p293) target = $region44
      $region43: #{qconv_block_pruned_forward.5} parent=39 // pred_region
        %s296 = smul.u32 3, %s15
        %p297 = scmp.lt.s32.totalorder %s296, 5
        %s298 = scalar_select %p297, %s296, 5
        %s299 = smul.addr %s298, 8
        %s300 = scalar_lea.vmem %s3, %s299
      $region44: #{qconv_block_pruned_forward.5} parent=39 // pred_fallthru
        _
    $region40: #{qconv_block_pruned_forward.5} parent=5 // pred_fallthru
      _
  $region6: #{qconv_block_pruned_forward.5} parent=0 // loop_footer
    %s13 = sadd.s32 1, %s9
  $region7: #{qconv_block_pruned_forward.5} parent=0 // loop_footer_branch
    %8 = sbr.rel target = $region3
  $region8: #{qconv_block_pruned_forward.5} parent=0 // loop_exit
    _

// kernel: qconv_block_pruned_forward.4
$region0: #{qconv_block_pruned_forward.4}
  #allocation0 [shape = 'u32[]', space=smem, size = 0x4, offset = 0x4, fixed_abs, tag = 'smem constant byte address 0x4 - core index']
  #allocation1 [shape = 'u32[144,128]{1,0:T(1,128)}', space=vmem, size = 0x12000, scoped, tag = 'internal scratch']
  #allocation2 [shape = 'bf16[8,640]{1,0:T(8,128)(2,1)}', space=vmem, size = 0x2800, scoped, tag = 'scratch operand']
  #allocation3 [shape = 'bf16[72,512]{1,0:T(8,128)(2,1)}', space=vmem, size = 0x12000, scoped, tag = 'scratch operand']
  %s0 = inlined_call_operand.vmem [shape: bf16[8,1280], index: 0, kind: input, shape index: {}]
  %s1 = inlined_call_operand.vmem [shape: bf16[8,72], index: 1, kind: input, shape index: {}]
  %s2 = inlined_call_operand.vmem [shape: f32[8,1], index: 2, kind: input, shape index: {}]
  %s3 = inlined_call_operand.vmem [shape: f32[8,1], index: 3, kind: input, shape index: {}]
  %s4 = inlined_call_operand.vmem [shape: f32[1,640], index: 4, kind: input, shape index: {}]
  %s5 = inlined_call_operand.vmem [shape: f32[1,512], index: 5, kind: input, shape index: {}]
  %s6 = inlined_call_operand.vmem [shape: bf16[8,1024], index: 6, kind: output, shape index: {0}]
  %s7 = inlined_call_operand.vmem [shape: f32[2,8,2], index: 7, kind: output, shape index: {1}]
  %8 = xla_tuple %s6, %s7
  %s9 = sld [smem:[#allocation0]]
  $region65: #{qconv_block_pruned_forward.4} parent=0
    _
  %s11 = ssub.s32 1, %s9
  %s12 = scalar_select 0, %s11, %s9
  loop: start=0, step=1, limit=4
  $region2: #{qconv_block_pruned_forward.4} parent=0 // loop_pre_header
    _
  $region3: #{qconv_block_pruned_forward.4} parent=0 // loop_header
    %s14 = sphi 0, %s18
    %p15 = scmp.ge.s32.totalorder %s14, 4
    %s24 = sphi 0, %s26
    %s27 = sphi 0, %s24
    %s28 = sphi 0, %s27
    %s44 = sphi 0, %s28
    %s48 = sphi 0, %s48
    %s50 = sphi 0, %s48
    %s51 = sphi 0, %s50
    %s65 = sphi 0, %s51
    %s69 = sphi 0, %s69
    %s71 = sphi 0, %s69
    %s72 = sphi 0, %s71
    %s86 = sphi 0, %s72
    %s90 = sphi 0, %s90
    %s92 = sphi 0, %s90
    %s93 = sphi 0, %s92
    %s107 = sphi 0, %s93
    %s111 = sphi 0, %s111
    %s113 = sphi 0, %s111
    %s114 = sphi 0, %s113
    %s128 = sphi 0, %s114
    %s132 = sphi 0, %s132
    %s134 = sphi 0, %s132
    %s135 = sphi 0, %s134
    %s149 = sphi 0, %s135
    %s155 = sphi 0, %s157
    %s158 = sphi 0, %s155
    %s159 = sphi 0, %s158
    %s175 = sphi 0, %s159
    %s181 = sphi 0, %s183
    %s184 = sphi 0, %s181
    %s185 = sphi 0, %s184
    %s201 = sphi 0, %s185
  $region4: #{qconv_block_pruned_forward.4} parent=0 // loop_header_branch
    %17 = sbr.rel (%p15) target = $region8
  $region5: #{qconv_block_pruned_forward.4} parent=0 // loop_body
    %s19 = ssub.s32 %s14, 1
    %s20 = ssub.s32 %s14, 2
    %s21 = sadd.s32 %s14, 1
    %s22 = ssub.s32 %s14, %s21
    %p23 = scmp.eq.s32.totalorder %s22, 0
    %s25 = sadd.s32 %s24, 1
    %s26 = scalar_select %p23, %s24, %s25
    %p29 = pneg %p23
    %p30 = scmp.eq.s32.totalorder %s14, 1
    %p31 = por %p29, %p30
    %p32 = scmp.ne.s32.totalorder %s24, %s27
    %p33 = scmp.eq.s32.totalorder %s14, 0
    %p34 = por %p32, %p33
    %p35 = scmp.ne.s32.totalorder %s24, %s27
    %p36 = scmp.eq.s32.totalorder %s19, 1
    %p37 = por %p35, %p36
    %p38 = scmp.ne.s32.totalorder %s27, %s28
    %p39 = scmp.eq.s32.totalorder %s19, 0
    %p40 = por %p38, %p39
    %p41 = scmp.ne.s32.totalorder %s27, %s28
    %p42 = scmp.eq.s32.totalorder %s20, 1
    %p43 = por %p41, %p42
    %p45 = scmp.ne.s32.totalorder %s28, %s44
    %p46 = scmp.eq.s32.totalorder %s20, 0
    %p47 = por %p45, %p46
    %s49 = sadd.s32 %s48, 1
    %p52 = scmp.eq.s32.totalorder %s14, 1
    %p53 = scmp.ne.s32.totalorder %s48, %s50
    %p54 = scmp.eq.s32.totalorder %s14, 0
    %p55 = por %p53, %p54
    %p56 = scmp.ne.s32.totalorder %s48, %s50
    %p57 = scmp.eq.s32.totalorder %s19, 1
    %p58 = por %p56, %p57
    %p59 = scmp.ne.s32.totalorder %s50, %s51
    %p60 = scmp.eq.s32.totalorder %s19, 0
    %p61 = por %p59, %p60
    %p62 = scmp.ne.s32.totalorder %s50, %s51
    %p63 = scmp.eq.s32.totalorder %s20, 1
    %p64 = por %p62, %p63
    %p66 = scmp.ne.s32.totalorder %s51, %s65
    %p67 = scmp.eq.s32.totalorder %s20, 0
    %p68 = por %p66, %p67
    %s70 = sadd.s32 %s69, 1
    %p73 = scmp.eq.s32.totalorder %s14, 1
    %p74 = scmp.ne.s32.totalorder %s69, %s71
    %p75 = scmp.eq.s32.totalorder %s14, 0
    %p76 = por %p74, %p75
    %p77 = scmp.ne.s32.totalorder %s69, %s71
    %p78 = scmp.eq.s32.totalorder %s19, 1
    %p79 = por %p77, %p78
    %p80 = scmp.ne.s32.totalorder %s71, %s72
    %p81 = scmp.eq.s32.totalorder %s19, 0
    %p82 = por %p80, %p81
    %p83 = scmp.ne.s32.totalorder %s71, %s72
    %p84 = scmp.eq.s32.totalorder %s20, 1
    %p85 = por %p83, %p84
    %p87 = scmp.ne.s32.totalorder %s72, %s86
    %p88 = scmp.eq.s32.totalorder %s20, 0
    %p89 = por %p87, %p88
    %s91 = sadd.s32 %s90, 1
    %p94 = scmp.eq.s32.totalorder %s14, 1
    %p95 = scmp.ne.s32.totalorder %s90, %s92
    %p96 = scmp.eq.s32.totalorder %s14, 0
    %p97 = por %p95, %p96
    %p98 = scmp.ne.s32.totalorder %s90, %s92
    %p99 = scmp.eq.s32.totalorder %s19, 1
    %p100 = por %p98, %p99
    %p101 = scmp.ne.s32.totalorder %s92, %s93
    %p102 = scmp.eq.s32.totalorder %s19, 0
    %p103 = por %p101, %p102
    %p104 = scmp.ne.s32.totalorder %s92, %s93
    %p105 = scmp.eq.s32.totalorder %s20, 1
    %p106 = por %p104, %p105
    %p108 = scmp.ne.s32.totalorder %s93, %s107
    %p109 = scmp.eq.s32.totalorder %s20, 0
    %p110 = por %p108, %p109
    %s112 = sadd.s32 %s111, 1
    %p115 = scmp.eq.s32.totalorder %s14, 1
    %p116 = scmp.ne.s32.totalorder %s111, %s113
    %p117 = scmp.eq.s32.totalorder %s14, 0
    %p118 = por %p116, %p117
    %p119 = scmp.ne.s32.totalorder %s111, %s113
    %p120 = scmp.eq.s32.totalorder %s19, 1
    %p121 = por %p119, %p120
    %p122 = scmp.ne.s32.totalorder %s113, %s114
    %p123 = scmp.eq.s32.totalorder %s19, 0
    %p124 = por %p122, %p123
    %p125 = scmp.ne.s32.totalorder %s113, %s114
    %p126 = scmp.eq.s32.totalorder %s20, 1
    %p127 = por %p125, %p126
    %p129 = scmp.ne.s32.totalorder %s114, %s128
    %p130 = scmp.eq.s32.totalorder %s20, 0
    %p131 = por %p129, %p130
    %s133 = sadd.s32 %s132, 1
    %p136 = scmp.eq.s32.totalorder %s14, 1
    %p137 = scmp.ne.s32.totalorder %s132, %s134
    %p138 = scmp.eq.s32.totalorder %s14, 0
    %p139 = por %p137, %p138
    %p140 = scmp.ne.s32.totalorder %s132, %s134
    %p141 = scmp.eq.s32.totalorder %s19, 1
    %p142 = por %p140, %p141
    %p143 = scmp.ne.s32.totalorder %s134, %s135
    %p144 = scmp.eq.s32.totalorder %s19, 0
    %p145 = por %p143, %p144
    %p146 = scmp.ne.s32.totalorder %s134, %s135
    %p147 = scmp.eq.s32.totalorder %s20, 1
    %p148 = por %p146, %p147
    %p150 = scmp.ne.s32.totalorder %s135, %s149
    %p151 = scmp.eq.s32.totalorder %s20, 0
    %p152 = por %p150, %p151
    %s153 = ssub.s32 %s14, %s21
    %p154 = scmp.eq.s32.totalorder %s153, 0
    %s156 = sadd.s32 %s155, 1
    %s157 = scalar_select %p154, %s155, %s156
    %p160 = pneg %p154
    %p161 = scmp.eq.s32.totalorder %s14, 1
    %p162 = por %p160, %p161
    %p163 = scmp.ne.s32.totalorder %s155, %s158
    %p164 = scmp.eq.s32.totalorder %s14, 0
    %p165 = por %p163, %p164
    %p166 = scmp.ne.s32.totalorder %s155, %s158
    %p167 = scmp.eq.s32.totalorder %s19, 1
    %p168 = por %p166, %p167
    %p169 = scmp.ne.s32.totalorder %s158, %s159
    %p170 = scmp.eq.s32.totalorder %s19, 0
    %p171 = por %p169, %p170
    %p172 = scmp.ne.s32.totalorder %s158, %s159
    %p173 = scmp.eq.s32.totalorder %s20, 1
    %p174 = por %p172, %p173
    %p176 = scmp.ne.s32.totalorder %s159, %s175
    %p177 = scmp.eq.s32.totalorder %s20, 0
    %p178 = por %p176, %p177
    %s179 = ssub.s32 %s14, %s21
    %p180 = scmp.eq.s32.totalorder %s179, 0
    %s182 = sadd.s32 %s181, 1
    %s183 = scalar_select %p180, %s181, %s182
    %p186 = pneg %p180
    %p187 = scmp.eq.s32.totalorder %s14, 1
    %p188 = por %p186, %p187
    %p189 = scmp.ne.s32.totalorder %s181, %s184
    %p190 = scmp.eq.s32.totalorder %s14, 0
    %p191 = por %p189, %p190
    %p192 = scmp.ne.s32.totalorder %s181, %s184
    %p193 = scmp.eq.s32.totalorder %s19, 1
    %p194 = por %p192, %p193
    %p195 = scmp.ne.s32.totalorder %s184, %s185
    %p196 = scmp.eq.s32.totalorder %s19, 0
    %p197 = por %p195, %p196
    %p198 = scmp.ne.s32.totalorder %s184, %s185
    %p199 = scmp.eq.s32.totalorder %s20, 1
    %p200 = por %p198, %p199
    %p202 = scmp.ne.s32.totalorder %s185, %s201
    %p203 = scmp.eq.s32.totalorder %s20, 0
    %p204 = por %p202, %p203
    %p205 = scmp.le.s32.totalorder 1, %s14
    %p206 = scmp.lt.s32.totalorder %s14, 3
    %p207 = pnand %p205, %p206
    %p208 = pneg %p207
    // Predicated region
    $region9: #{qconv_block_pruned_forward.4} parent=5 // pred_check
      _
    $region10: #{qconv_block_pruned_forward.4} parent=5 // pred_check_branch
      %210 = sbr.rel (%p207) target = $region12
    $region11: #{qconv_block_pruned_forward.4} parent=5 // pred_region
      %s211 = ssub.s32 %s14, 1
      // Predicated region
      $region13: #{qconv_block_pruned_forward.4} parent=11 // pred_check
        %p212 = pneg %p61
      $region14: #{qconv_block_pruned_forward.4} parent=11 // pred_check_branch
        %214 = sbr.rel (%p212) target = $region16
      $region15: #{qconv_block_pruned_forward.4} parent=11 // pred_region
        _
      $region16: #{qconv_block_pruned_forward.4} parent=11 // pred_fallthru
        _
      // Predicated region
      $region17: #{qconv_block_pruned_forward.4} parent=11 // pred_check
        %p215 = pneg %p82
      $region18: #{qconv_block_pruned_forward.4} parent=11 // pred_check_branch
        %217 = sbr.rel (%p215) target = $region20
      $region19: #{qconv_block_pruned_forward.4} parent=11 // pred_region
        _
      $region20: #{qconv_block_pruned_forward.4} parent=11 // pred_fallthru
        _
      // Predicated region
      $region21: #{qconv_block_pruned_forward.4} parent=11 // pred_check
        %p218 = pneg %p103
      $region22: #{qconv_block_pruned_forward.4} parent=11 // pred_check_branch
        %220 = sbr.rel (%p218) target = $region24
      $region23: #{qconv_block_pruned_forward.4} parent=11 // pred_region
        _
      $region24: #{qconv_block_pruned_forward.4} parent=11 // pred_fallthru
        _
      // Predicated region
      $region25: #{qconv_block_pruned_forward.4} parent=11 // pred_check
        %p221 = pneg %p124
      $region26: #{qconv_block_pruned_forward.4} parent=11 // pred_check_branch
        %223 = sbr.rel (%p221) target = $region28
      $region27: #{qconv_block_pruned_forward.4} parent=11 // pred_region
        _
      $region28: #{qconv_block_pruned_forward.4} parent=11 // pred_fallthru
        _
      // Predicated region
      $region29: #{qconv_block_pruned_forward.4} parent=11 // pred_check
        %p224 = pneg %p145
      $region30: #{qconv_block_pruned_forward.4} parent=11 // pred_check_branch
        %226 = sbr.rel (%p224) target = $region32
      $region31: #{qconv_block_pruned_forward.4} parent=11 // pred_region
        _
      $region32: #{qconv_block_pruned_forward.4} parent=11 // pred_fallthru
        _
    $region12: #{qconv_block_pruned_forward.4} parent=5 // pred_fallthru
      _
    %p227 = scmp.lt.s32.totalorder %s14, 2
    // Predicated region
    $region33: #{qconv_block_pruned_forward.4} parent=5 // pred_check
      %p228 = pneg %p227
    $region34: #{qconv_block_pruned_forward.4} parent=5 // pred_check_branch
      %230 = sbr.rel (%p228) target = $region36
    $region35: #{qconv_block_pruned_forward.4} parent=5 // pred_region
      // Predicated region
      $region37: #{qconv_block_pruned_forward.4} parent=35 // pred_check
        %p231 = pneg %p34
      $region38: #{qconv_block_pruned_forward.4} parent=35 // pred_check_branch
        %233 = sbr.rel (%p231) target = $region40
      $region39: #{qconv_block_pruned_forward.4} parent=35 // pred_region
        %s234 = smul.u32 5, %s14
        %p235 = scmp.lt.s32.totalorder %s234, 9
        %s236 = scalar_select %p235, %s234, 9
        %s237 = smul.addr %s236, 4
        %s238 = scalar_lea.vmem %s0, %s237
        %s239 = smul.u32 5, %s14
      $region40: #{qconv_block_pruned_forward.4} parent=35 // pred_fallthru
        _
    $region36: #{qconv_block_pruned_forward.4} parent=5 // pred_fallthru
      _
    %p240 = scmp.le.s32.totalorder 1, %s14
    %p241 = scmp.lt.s32.totalorder %s14, 3
    %p242 = pnand %p240, %p241
    %p243 = pneg %p242
    // Predicated region
    $region41: #{qconv_block_pruned_forward.4} parent=5 // pred_check
      _
    $region42: #{qconv_block_pruned_forward.4} parent=5 // pred_check_branch
      %245 = sbr.rel (%p242) target = $region44
    $region43: #{qconv_block_pruned_forward.4} parent=5 // pred_region
      %s246 = ssub.s32 %s14, 1
      %s247 = smul.u32 5, %s19
      %p248 = scmp.lt.s32.totalorder %s247, 9
      %s249 = scalar_select %p248, %s247, 9
      %s250 = smul.addr %s249, 4
      %s251 = scalar_lea.vmem %s0, %s250
      %p252 = pneg %p40
      %p253 = pneg %p37
      %p254 = pneg %p61
      %p255 = pneg %p58
      %p256 = pneg %p82
      %p257 = pneg %p79
      %p258 = pneg %p103
      %p259 = pneg %p100
      %p260 = pneg %p124
      %p261 = pneg %p121
      %p262 = pneg %p145
      %p263 = pneg %p142
      %p264 = pneg %p171
      %p265 = pneg %p168
      %s266 = smul.u32 4, %s19
      %p267 = scmp.lt.s32.totalorder %s266, 7
      %s268 = scalar_select %p267, %s266, 7
      %s269 = smul.addr %s268, 4
      %s270 = scalar_lea.vmem %s6, %s269
      %p271 = pneg %p197
      %p272 = pneg %p194
      %p273 = scmp.lt.s32.totalorder %s19, 1
      %s274 = scalar_select %p273, %s19, 1
      %s275 = smul.addr %s274, 8
      %s276 = scalar_lea.vmem %s7, %s275
      %s277 = smul.u32 5, %s19
      %p278 = scmp.lt.s32.totalorder %s277, 9
      %s279 = scalar_select %p278, %s277, 9
      %s280 = smul.addr %s279, 4
      %s281 = scalar_lea.vmem %s0, %s280
      %s282 = smul.u32 5, %s19
      %s283 = smul.u32 4, %s19
      %p284 = scmp.lt.s32.totalorder %s283, 7
      %s285 = scalar_select %p284, %s283, 7
      %s286 = smul.addr %s285, 4
      %s287 = scalar_lea.vmem %s6, %s286
      %s288 = smul.u32 4, %s19
      %p289 = scmp.lt.s32.totalorder %s19, 1
      %s290 = scalar_select %p289, %s19, 1
      %s291 = smul.addr %s290, 8
      %s292 = scalar_lea.vmem %s7, %s291
      %v294 = vld [vmem:[%s281] sm:$0xff]
      %v295 = vld [vmem:[%s281 + $0x8] sm:$0xff]
      %v296 = vld [vmem:[%s281 + $0x10] sm:$0xf]
      %v297 = vunpack.c.l.bf16 %v294
      %v298 = vunpack.c.h.bf16 %v294
      %v299 = vunpack.c.l.bf16 %v295
      %v300 = vunpack.c.h.bf16 %v295
      %v301 = vunpack.c.l.bf16 %v296
      %v302 = vld [vmem:[%s2] sm:$0xff]
      %304 = vset.pattern.permute.xlu0 0
      %305 = vperm.xlu0 %304, %v302
      %v306 = vpop.permute.xlu0 %305
      %v308 = vmul.f32 %v297, %v306
      %v309 = vmul.f32 %v298, %v306
      %v310 = vmul.f32 %v299, %v306
      %v311 = vmul.f32 %v300, %v306
      %v312 = vmul.f32 %v301, %v306
      %v313 = vld [vmem:[%s3] sm:$0xff]
      %315 = vset.pattern.permute.xlu0 0
      %316 = vperm.xlu0 %315, %v313
      %v317 = vpop.permute.xlu0 %316
      %v319 = vadd.f32 %v308, %v317
      %v320 = vadd.f32 %v309, %v317
      %v321 = vadd.f32 %v310, %v317
      %v322 = vadd.f32 %v311, %v317
      %v323 = vadd.f32 %v312, %v317
      %v324 = vmax.f32 %v319, 0.0
      %v325 = vmax.f32 %v320, 0.0
      %v326 = vmax.f32 %v321, 0.0
      %v327 = vmax.f32 %v322, 0.0
      %v328 = vmax.f32 %v323, 0.0
      %v329 = vld [vmem:[%s4] sm:$0x1f]
      %v331 = vlaneseq
      %v332 = vshrl.u32 %v331, 7
      %v333 = vsub.s32 0, %v332
      %v334 = vrot.slane %v329, %v333
      %v335 = vlaneseq
      %v336 = vshrl.u32 %v335, 7
      %v337 = vsub.s32 1, %v336
      %v338 = vrot.slane %v329, %v337
      %v339 = vlaneseq
      %v340 = vshrl.u32 %v339, 7
      %v341 = vsub.s32 2, %v340
      %v342 = vrot.slane %v329, %v341
      %v343 = vlaneseq
      %v344 = vshrl.u32 %v343, 7
      %v345 = vsub.s32 3, %v344
      %v346 = vrot.slane %v329, %v345
      %v347 = vlaneseq
      %v348 = vshrl.u32 %v347, 7
      %v349 = vsub.s32 4, %v348
      %v350 = vrot.slane %v329, %v349
      %v356 = vmul.f32 %v324, %v334
      %v357 = vmul.f32 %v325, %v338
      %v358 = vmul.f32 %v326, %v342
      %v359 = vmul.f32 %v327, %v346
      %v360 = vmul.f32 %v328, %v350
      %v361 = vpack.c.bf16 %v356, %v356
      %v362 = vpack.c.bf16 %v357, %v357
      %v363 = vpack.c.bf16 %v358, %v358
      %v364 = vpack.c.bf16 %v359, %v359
      %v365 = vpack.c.bf16 %v360, %v360
      %v371 = vunpack.c.l.b16 %v361
      %v372 = vunpack.c.l.b16 %v362
      %v373 = vunpack.c.l.b16 %v363
      %v374 = vunpack.c.l.b16 %v364
      %v375 = vunpack.c.l.b16 %v365
      %v376 = vpack.c.b16 %v372, %v371
      %v377 = vpack.c.b16 %v374, %v373
      %v378 = vpack.c.b16 %v375, %v375
      %382 = vst [vmem:[#allocation2] sm:$0xff] %v376
      %383 = vst [vmem:[#allocation2 + $0x8] sm:$0xff] %v377
      %384 = vst [vmem:[#allocation2 + $0x10] sm:$0xf] %v378
      %v385 = vld [vmem:[#allocation2] sm:$0xff]
      %v386 = vld [vmem:[#allocation2 + $0x8] sm:$0xff]
      %387 = vst [vmem:[#allocation3] sm:$0xff] %v385
      %388 = vst [vmem:[#allocation3 + $0x8] sm:$0xff] %v386
      %v389 = vld [vmem:[#allocation2] sm:$0xff]
      %v390 = vld [vmem:[#allocation2 + $0x8] sm:$0xff]
      %v391 = vld [vmem:[#allocation2 + $0x10] sm:$0xf]
      %395 = vrot.lane.b32.xlu0 %v389, 127
      %v396 = vpop.permute.xlu0 %395
      %397 = vrot.lane.b32.xlu0 %v390, 127
      %v398 = vpop.permute.xlu0 %397
      %399 = vrot.lane.b32.xlu0 %v391, 127
      %v400 = vpop.permute.xlu0 %399
      %v401 = vrot.slane %v396, 4
      %v402 = vrot.slane %v398, 4
      %v403 = vrot.slane %v400, 4
      %vm404 = vcmask 1043456
      %v405 = vsel %vm404, %v401, %v402
      %vm406 = vcmask 1039360
      %v407 = vsel %vm406, %v396, %v405
      %v408 = vsel %vm404, %v402, %v403
      %v409 = vsel %vm406, %v398, %v408
      %412 = vst [vmem:[#allocation3 + $0x10] sm:$0xff] %v407
      %413 = vst [vmem:[#allocation3 + $0x18] sm:$0xff] %v409
      %v414 = vld [vmem:[#allocation2] sm:$0xff]
      %v415 = vld [vmem:[#allocation2 + $0x8] sm:$0xff]
      %v416 = vld [vmem:[#allocation2 + $0x10] sm:$0xf]
      %420 = vrot.lane.b32.xlu0 %v414, 126
      %v421 = vpop.permute.xlu0 %420
      %422 = vrot.lane.b32.xlu0 %v415, 126
      %v423 = vpop.permute.xlu0 %422
      %424 = vrot.lane.b32.xlu0 %v416, 126
      %v425 = vpop.permute.xlu0 %424
      %v426 = vrot.slane %v421, 4
      %v427 = vrot.slane %v423, 4
      %v428 = vrot.slane %v425, 4
      %v429 = vsel %vm404, %v426, %v427
      %vm430 = vcmask 1031168
      %v431 = vsel %vm430, %v421, %v429
      %v432 = vsel %vm404, %v427, %v428
      %v433 = vsel %vm430, %v423, %v432
      %436 = vst [vmem:[#allocation3 + $0x20] sm:$0xff] %v431
      %437 = vst [vmem:[#allocation3 + $0x28] sm:$0xff] %v433
      %v438 = vld [vmem:[#allocation2] sm:$0xff]
      %v439 = vld [vmem:[#allocation2 + $0x8] sm:$0xff]
      %v440 = vld [vmem:[#allocation2 + $0x10] sm:$0xf]
      %444 = vrot.lane.b32.xlu0 %v438, 108
      %v445 = vpop.permute.xlu0 %444
      %446 = vrot.lane.b32.xlu0 %v439, 108
      %v447 = vpop.permute.xlu0 %446
      %448 = vrot.lane.b32.xlu0 %v440, 108
      %v449 = vpop.permute.xlu0 %448
      %v450 = vrot.slane %v445, 4
      %v451 = vrot.slane %v447, 4
      %v452 = vrot.slane %v449, 4
      %v453 = vsel %vm404, %v450, %v451
      %vm454 = vcmask 883712
      %v455 = vsel %vm454, %v445, %v453
      %v456 = vsel %vm404, %v451, %v452
      %v457 = vsel %vm454, %v447, %v456
      %460 = vst [vmem:[#allocation3 + $0x30] sm:$0xff] %v455
      %461 = vst [vmem:[#allocation3 + $0x38] sm:$0xff] %v457
      %v462 = vld [vmem:[#allocation2] sm:$0xff]
      %v463 = vld [vmem:[#allocation2 + $0x8] sm:$0xff]
      %v464 = vld [vmem:[#allocation2 + $0x10] sm:$0xf]
      %468 = vrot.lane.b32.xlu0 %v462, 107
      %v469 = vpop.permute.xlu0 %468
      %470 = vrot.lane.b32.xlu0 %v463, 107
      %v471 = vpop.permute.xlu0 %470
      %472 = vrot.lane.b32.xlu0 %v464, 107
      %v473 = vpop.permute.xlu0 %472
      %v474 = vrot.slane %v469, 4
      %v475 = vrot.slane %v471, 4
      %v476 = vrot.slane %v473, 4
      %v477 = vsel %vm404, %v474, %v475
      %vm478 = vcmask 875520
      %v479 = vsel %vm478, %v469, %v477
      %v480 = vsel %vm404, %v475, %v476
      %v481 = vsel %vm478, %v471, %v480
      %484 = vst [vmem:[#allocation3 + $0x40] sm:$0xff] %v479
      %485 = vst [vmem:[#allocation3 + $0x48] sm:$0xff] %v481
      %v486 = vld [vmem:[#allocation2] sm:$0xff]
      %v487 = vld [vmem:[#allocation2 + $0x8] sm:$0xff]
      %v488 = vld [vmem:[#allocation2 + $0x10] sm:$0xf]
      %492 = vrot.lane.b32.xlu0 %v486, 106
      %v493 = vpop.permute.xlu0 %492
      %494 = vrot.lane.b32.xlu0 %v487, 106
      %v495 = vpop.permute.xlu0 %494
      %496 = vrot.lane.b32.xlu0 %v488, 106
      %v497 = vpop.permute.xlu0 %496
      %v498 = vrot.slane %v493, 4
      %v499 = vrot.slane %v495, 4
      %v500 = vrot.slane %v497, 4
      %v501 = vsel %vm404, %v498, %v499
      %vm502 = vcmask 867328
      %v503 = vsel %vm502, %v493, %v501
      %v504 = vsel %vm404, %v499, %v500
      %v505 = vsel %vm502, %v495, %v504
      %508 = vst [vmem:[#allocation3 + $0x50] sm:$0xff] %v503
      %509 = vst [vmem:[#allocation3 + $0x58] sm:$0xff] %v505
      %v510 = vld [vmem:[#allocation2] sm:$0xff]
      %v511 = vld [vmem:[#allocation2 + $0x8] sm:$0xff]
      %v512 = vld [vmem:[#allocation2 + $0x10] sm:$0xf]
      %516 = vrot.lane.b32.xlu0 %v510, 88
      %v517 = vpop.permute.xlu0 %516
      %518 = vrot.lane.b32.xlu0 %v511, 88
      %v519 = vpop.permute.xlu0 %518
      %520 = vrot.lane.b32.xlu0 %v512, 88
      %v521 = vpop.permute.xlu0 %520
      %v522 = vrot.slane %v517, 4
      %v523 = vrot.slane %v519, 4
      %v524 = vrot.slane %v521, 4
      %v525 = vsel %vm404, %v522, %v523
      %vm526 = vcmask 719872
      %v527 = vsel %vm526, %v517, %v525
      %v528 = vsel %vm404, %v523, %v524
      %v529 = vsel %vm526, %v519, %v528
      %532 = vst [vmem:[#allocation3 + $0x60] sm:$0xff] %v527
      %533 = vst [vmem:[#allocation3 + $0x68] sm:$0xff] %v529
      %v534 = vld [vmem:[#allocation2] sm:$0xff]
      %v535 = vld [vmem:[#allocation2 + $0x8] sm:$0xff]
      %v536 = vld [vmem:[#allocation2 + $0x10] sm:$0xf]
      %540 = vrot.lane.b32.xlu0 %v534, 87
      %v541 = vpop.permute.xlu0 %540
      %542 = vrot.lane.b32.xlu0 %v535, 87
      %v543 = vpop.permute.xlu0 %542
      %544 = vrot.lane.b32.xlu0 %v536, 87
      %v545 = vpop.permute.xlu0 %544
      %v546 = vrot.slane %v541, 4
      %v547 = vrot.slane %v543, 4
      %v548 = vrot.slane %v545, 4
      %v549 = vsel %vm404, %v546, %v547
      %vm550 = vcmask 711680
      %v551 = vsel %vm550, %v541, %v549
      %v552 = vsel %vm404, %v547, %v548
      %v553 = vsel %vm550, %v543, %v552
      %556 = vst [vmem:[#allocation3 + $0x70] sm:$0xff] %v551
      %557 = vst [vmem:[#allocation3 + $0x78] sm:$0xff] %v553
      %v558 = vld [vmem:[#allocation2] sm:$0xff]
      %v559 = vld [vmem:[#allocation2 + $0x8] sm:$0xff]
      %v560 = vld [vmem:[#allocation2 + $0x10] sm:$0xf]
      %564 = vrot.lane.b32.xlu0 %v558, 86
      %v565 = vpop.permute.xlu0 %564
      %566 = vrot.lane.b32.xlu0 %v559, 86
      %v567 = vpop.permute.xlu0 %566
      %568 = vrot.lane.b32.xlu0 %v560, 86
      %v569 = vpop.permute.xlu0 %568
      %v570 = vrot.slane %v565, 4
      %v571 = vrot.slane %v567, 4
      %v572 = vrot.slane %v569, 4
      %v573 = vsel %vm404, %v570, %v571
      %vm574 = vcmask 703488
      %v575 = vsel %vm574, %v565, %v573
      %v576 = vsel %vm404, %v571, %v572
      %v577 = vsel %vm574, %v567, %v576
      %580 = vst [vmem:[#allocation3 + $0x80] sm:$0xff] %v575
      %581 = vst [vmem:[#allocation3 + $0x88] sm:$0xff] %v577
      %v582 = vld [vmem:[%s1] sm:$0xf]
      %v583 = vld [vmem:[#allocation3] sm:$0xff]
      %v584 = vld [vmem:[#allocation3 + $0x8] sm:$0xff]
      %v585 = vld [vmem:[#allocation3 + $0x10] sm:$0xff]
      %v586 = vld [vmem:[#allocation3 + $0x18] sm:$0xff]
      %v587 = vld [vmem:[#allocation3 + $0x20] sm:$0xff]
      %v588 = vld [vmem:[#allocation3 + $0x28] sm:$0xff]
      %v589 = vld [vmem:[#allocation3 + $0x30] sm:$0xff]
      %v590 = vld [vmem:[#allocation3 + $0x38] sm:$0xff]
      %v591 = vld [vmem:[#allocation3 + $0x40] sm:$0xff]
      %v592 = vld [vmem:[#allocation3 + $0x48] sm:$0xff]
      %v593 = vld [vmem:[#allocation3 + $0x50] sm:$0xff]
      %v594 = vld [vmem:[#allocation3 + $0x58] sm:$0xff]
      %v595 = vld [vmem:[#allocation3 + $0x60] sm:$0xff]
      %v596 = vld [vmem:[#allocation3 + $0x68] sm:$0xff]
      %v597 = vld [vmem:[#allocation3 + $0x70] sm:$0xff]
      %v598 = vld [vmem:[#allocation3 + $0x78] sm:$0xff]
      %v599 = vld [vmem:[#allocation3 + $0x80] sm:$0xff]
      %v600 = vld [vmem:[#allocation3 + $0x88] sm:$0xff]
      %v619 = vunpack.c.l.b16 %v583
      %v620 = vunpack.c.h.b16 %v583
      %v621 = vunpack.c.l.b16 %v584
      %v622 = vunpack.c.h.b16 %v584
      %v623 = vunpack.c.l.b16 %v585
      %v624 = vunpack.c.h.b16 %v585
      %v625 = vunpack.c.l.b16 %v586
      %v626 = vunpack.c.h.b16 %v586
      %v627 = vunpack.c.l.b16 %v587
      %v628 = vunpack.c.h.b16 %v587
      %v629 = vunpack.c.l.b16 %v588
      %v630 = vunpack.c.h.b16 %v588
      %v631 = vunpack.c.l.b16 %v589
      %v632 = vunpack.c.h.b16 %v589
      %v633 = vunpack.c.l.b16 %v590
      %v634 = vunpack.c.h.b16 %v590
      %v635 = vunpack.c.l.b16 %v591
      %v636 = vunpack.c.h.b16 %v591
      %v637 = vunpack.c.l.b16 %v592
      %v638 = vunpack.c.h.b16 %v592
      %v639 = vunpack.c.l.b16 %v593
      %v640 = vunpack.c.h.b16 %v593
      %v641 = vunpack.c.l.b16 %v594
      %v642 = vunpack.c.h.b16 %v594
      %v643 = vunpack.c.l.b16 %v595
      %v644 = vunpack.c.h.b16 %v595
      %v645 = vunpack.c.l.b16 %v596
      %v646 = vunpack.c.h.b16 %v596
      %v647 = vunpack.c.l.b16 %v597
      %v648 = vunpack.c.h.b16 %v597
      %v649 = vunpack.c.l.b16 %v598
      %v650 = vunpack.c.h.b16 %v598
      %v651 = vunpack.c.l.b16 %v599
      %v652 = vunpack.c.h.b16 %v599
      %v653 = vunpack.c.l.b16 %v600
      %v654 = vunpack.c.h.b16 %v600
      %v655 = vpack.c.b16 %v623, %v619
      %v656 = vpack.c.b16 %v624, %v620
      %v657 = vpack.c.b16 %v625, %v621
      %v658 = vpack.c.b16 %v626, %v622
      %v659 = vpack.c.b16 %v631, %v627
      %v660 = vpack.c.b16 %v632, %v628
      %v661 = vpack.c.b16 %v633, %v629
      %v662 = vpack.c.b16 %v634, %v630
      %v663 = vpack.c.b16 %v639, %v635
      %v664 = vpack.c.b16 %v640, %v636
      %v665 = vpack.c.b16 %v641, %v637
      %v666 = vpack.c.b16 %v642, %v638
      %v667 = vpack.c.b16 %v647, %v643
      %v668 = vpack.c.b16 %v648, %v644
      %v669 = vpack.c.b16 %v649, %v645
      %v670 = vpack.c.b16 %v650, %v646
      %v671 = vpack.c.b16 %v651, %v651
      %v672 = vpack.c.b16 %v652, %v652
      %v673 = vpack.c.b16 %v653, %v653
      %v674 = vpack.c.b16 %v654, %v654
      %vm691 = vcmask 588800
      %v693 = vsel %vm691, %v582, 0
      %vm695 = vcmask 1043456
      %v697 = vsel %vm695, %v671, 0
      %v700 = vsel %vm695, %v672, 0
      %v703 = vsel %vm695, %v673, 0
      %v706 = vsel %vm695, %v674, 0
      %708 = vmatprep.subr.bf16.mxu0 %v656
      %709 = vmatpush1.bf16.msra.mxu0 %v655
      %710 = vmatprep.subr.bf16.mxu0 %v660
      %711 = vmatpush1.bf16.msra.mxu0 %v659
      %712 = vmatprep.subr.bf16.mxu0 %v664
      %713 = vmatpush1.bf16.msra.mxu0 %v663
      %714 = vmatprep.subr.bf16.mxu0 %v668
      %715 = vmatpush1.bf16.msra.mxu0 %v667
      %716 = vmatprep.subr.bf16.mxu0 %v700
      %717 = vmatpush1.bf16.msra.mxu0 %v697
      %718 = vmatprep.subr.bf16.mxu0 0
      %719 = vmatpush1.bf16.msra.mxu0 0
      %720 = vmatprep.subr.bf16.mxu0 0
      %721 = vmatpush1.bf16.msra.mxu0 0
      %722 = vmatprep.subr.bf16.mxu0 0
      %723 = vmatpush1.bf16.msra.mxu0 0
      %724 = vmatprep.subr.bf16.mxu0 0
      %725 = vmatpush1.bf16.msra.mxu0 0
      %726 = vmatprep.subr.bf16.mxu0 0
      %727 = vmatpush1.bf16.msra.mxu0 0
      %728 = vmatprep.subr.bf16.mxu0 0
      %729 = vmatpush1.bf16.msra.mxu0 0
      %730 = vmatprep.subr.bf16.mxu0 0
      %731 = vmatpush1.bf16.msra.mxu0 0
      %732 = vmatprep.subr.bf16.mxu0 0
      %733 = vmatpush1.bf16.msra.mxu0 0
      %734 = vmatprep.subr.bf16.mxu0 0
      %735 = vmatpush1.bf16.msra.mxu0 0
      %736 = vmatprep.subr.bf16.mxu0 0
      %737 = vmatpush1.bf16.msra.mxu0 0
      %738 = vmatprep.subr.bf16.mxu0 0
      %739 = vmatpush1.bf16.msra.mxu0 0
      %740 = vmatprep.mubr.bf16.mxu0 0
      %741 = vmatmul.mubr.bf16.gmra.mrb[0].mxu0 %v693
      %v742 = vpop.f32.mrb[0].mxu0
      %v743 = vadd.f32 0.0, %v742
      %v744 = vpop.f32.mrb[0].mxu0
      %v745 = vadd.f32 0.0, %v744
      %v746 = vpop.f32.mrb[0].mxu0
      %v747 = vpop.f32.mrb[0].mxu0
      %748 = vdwg.mxu0
      %749 = vmatprep.subr.bf16.mxu0 %v658
      %750 = vmatpush1.bf16.msra.mxu0 %v657
      %751 = vmatprep.subr.bf16.mxu0 %v662
      %752 = vmatpush1.bf16.msra.mxu0 %v661
      %753 = vmatprep.subr.bf16.mxu0 %v666
      %754 = vmatpush1.bf16.msra.mxu0 %v665
      %755 = vmatprep.subr.bf16.mxu0 %v670
      %756 = vmatpush1.bf16.msra.mxu0 %v669
      %757 = vmatprep.subr.bf16.mxu0 %v706
      %758 = vmatpush1.bf16.msra.mxu0 %v703
      %759 = vmatprep.subr.bf16.mxu0 0
      %760 = vmatpush1.bf16.msra.mxu0 0
      %761 = vmatprep.subr.bf16.mxu0 0
      %762 = vmatpush1.bf16.msra.mxu0 0
      %763 = vmatprep.subr.bf16.mxu0 0
      %764 = vmatpush1.bf16.msra.mxu0 0
      %765 = vmatprep.subr.bf16.mxu0 0
      %766 = vmatpush1.bf16.msra.mxu0 0
      %767 = vmatprep.subr.bf16.mxu0 0
      %768 = vmatpush1.bf16.msra.mxu0 0
      %769 = vmatprep.subr.bf16.mxu0 0
      %770 = vmatpush1.bf16.msra.mxu0 0
      %771 = vmatprep.subr.bf16.mxu0 0
      %772 = vmatpush1.bf16.msra.mxu0 0
      %773 = vmatprep.subr.bf16.mxu0 0
      %774 = vmatpush1.bf16.msra.mxu0 0
      %775 = vmatprep.subr.bf16.mxu0 0
      %776 = vmatpush1.bf16.msra.mxu0 0
      %777 = vmatprep.subr.bf16.mxu0 0
      %778 = vmatpush1.bf16.msra.mxu0 0
      %779 = vmatprep.subr.bf16.mxu0 0
      %780 = vmatpush1.bf16.msra.mxu0 0
      %781 = vmatprep.mubr.bf16.mxu0 0
      %782 = vmatmul.mubr.bf16.gmra.mrb[0].mxu0 %v693
      %v783 = vpop.f32.mrb[0].mxu0
      %v784 = vadd.f32 0.0, %v783
      %v785 = vpop.f32.mrb[0].mxu0
      %v786 = vadd.f32 0.0, %v785
      %v787 = vpop.f32.mrb[0].mxu0
      %v788 = vpop.f32.mrb[0].mxu0
      %789 = vdwg.mxu0
      %v790 = vpack.c.bf16 %v743, %v743
      %v791 = vpack.c.bf16 %v745, %v745
      %v792 = vpack.c.bf16 %v784, %v784
      %v793 = vpack.c.bf16 %v786, %v786
      %v798 = vunpack.c.l.b16 %v790
      %v799 = vunpack.c.l.b16 %v791
      %v800 = vunpack.c.l.b16 %v792
      %v801 = vunpack.c.l.b16 %v793
      %v802 = vpack.c.b16 %v799, %v798
      %v803 = vpack.c.b16 %v801, %v800
      %806 = vst [vmem:[%s287] sm:$0xff] %v802
      %807 = vst [vmem:[%s287 + $0x8] sm:$0xff] %v803
      %v808 = vunpack.c.l.bf16 %v790
      %v809 = vunpack.c.l.bf16 %v791
      %v810 = vunpack.c.l.bf16 %v792
      %v811 = vunpack.c.l.bf16 %v793
      %v812 = vld [vmem:[%s5] sm:$0xf]
      %v814 = vlaneseq
      %v815 = vshrl.u32 %v814, 7
      %v816 = vsub.s32 0, %v815
      %v817 = vrot.slane %v812, %v816
      %v818 = vlaneseq
      %v819 = vshrl.u32 %v818, 7
      %v820 = vsub.s32 1, %v819
      %v821 = vrot.slane %v812, %v820
      %v822 = vlaneseq
      %v823 = vshrl.u32 %v822, 7
      %v824 = vsub.s32 2, %v823
      %v825 = vrot.slane %v812, %v824
      %v826 = vlaneseq
      %v827 = vshrl.u32 %v826, 7
      %v828 = vsub.s32 3, %v827
      %v829 = vrot.slane %v812, %v828
      %v834 = vmul.f32 %v808, %v817
      %v835 = vmul.f32 %v809, %v821
      %v836 = vmul.f32 %v810, %v825
      %v837 = vmul.f32 %v811, %v829
      %v838 = vadd.f32 %v834, %v835
      %v839 = vadd.f32 %v838, %v836
      %v840 = vadd.f32 %v839, %v837
      %841 = vadd.xlane.f32.xlu0 %v840
      %v842 = vpop.xlane.xlu0 %841
      %v843 = vmul.f32 %v834, %v834
      %v844 = vmul.f32 %v835, %v835
      %v845 = vmul.f32 %v836, %v836
      %v846 = vmul.f32 %v837, %v837
      %v847 = vadd.f32 %v843, %v844
      %v848 = vadd.f32 %v847, %v845
      %v849 = vadd.f32 %v848, %v846
      %850 = vadd.xlane.f32.xlu0 %v849
      %v851 = vpop.xlane.xlu0 %850
      %vm852 = vcmask 7168
      %v853 = vsel %vm852, %v842, %v851
      %vm854 = vcmask 15360
      %855 = vst.msk [vmem:[%s292] sm:$0xff] %vm854, %v853
      %s856 = smul.u32 4, %s19
      %p857 = scmp.lt.s32.totalorder %s856, 7
      %s858 = scalar_select %p857, %s856, 7
      %s859 = smul.addr %s858, 4
      %s860 = scalar_lea.vmem %s6, %s859
      %p861 = scmp.lt.s32.totalorder %s19, 1
      %s862 = scalar_select %p861, %s19, 1
      %s863 = smul.addr %s862, 8
      %s864 = scalar_lea.vmem %s7, %s863
      // Predicated region
      $region45: #{qconv_block_pruned_forward.4} parent=43 // pred_check
        %p865 = pneg %p168
      $region46: #{qconv_block_pruned_forward.4} parent=43 // pred_check_branch
        %867 = sbr.rel (%p865) target = $region48
      $region47: #{qconv_block_pruned_forward.4} parent=43 // pred_region
        %s868 = smul.u32 4, %s19
      $region48: #{qconv_block_pruned_forward.4} parent=43 // pred_fallthru
        _
      // Predicated region
      $region49: #{qconv_block_pruned_forward.4} parent=43 // pred_check
        %p869 = pneg %p194
      $region50: #{qconv_block_pruned_forward.4} parent=43 // pred_check_branch
        %871 = sbr.rel (%p869) target = $region52
      $region51: #{qconv_block_pruned_forward.4} parent=43 // pred_region
        _
      $region52: #{qconv_block_pruned_forward.4} parent=43 // pred_fallthru
        _
    $region44: #{qconv_block_pruned_forward.4} parent=5 // pred_fallthru
      _
    %p872 = scmp.le.s32.totalorder 2, %s14
    // Predicated region
    $region53: #{qconv_block_pruned_forward.4} parent=5 // pred_check
      %p873 = pneg %p872
    $region54: #{qconv_block_pruned_forward.4} parent=5 // pred_check_branch
      %875 = sbr.rel (%p873) target = $region56
    $region55: #{qconv_block_pruned_forward.4} parent=5 // pred_region
      %s876 = ssub.s32 %s14, 2
      // Predicated region
      $region57: #{qconv_block_pruned_forward.4} parent=55 // pred_check
        %p877 = pneg %p174
      $region58: #{qconv_block_pruned_forward.4} parent=55 // pred_check_branch
        %879 = sbr.rel (%p877) target = $region60
      $region59: #{qconv_block_pruned_forward.4} parent=55 // pred_region
        %s880 = smul.u32 4, %s20
        %p881 = scmp.lt.s32.totalorder %s880, 7
        %s882 = scalar_select %p881, %s880, 7
        %s883 = smul.addr %s882, 4
        %s884 = scalar_lea.vmem %s6, %s883
      $region60: #{qconv_block_pruned_forward.4} parent=55 // pred_fallthru
        _
      // Predicated region
      $region61: #{qconv_block_pruned_forward.4} parent=55 // pred_check
        %p885 = pneg %p200
      $region62: #{qconv_block_pruned_forward.4} parent=55 // pred_check_branch
        %887 = sbr.rel (%p885) target = $region64
      $region63: #{qconv_block_pruned_forward.4} parent=55 // pred_region
        %p888 = scmp.lt.s32.totalorder %s20, 1
        %s889 = scalar_select %p888, %s20, 1
        %s890 = smul.addr %s889, 8
        %s891 = scalar_lea.vmem %s7, %s890
      $region64: #{qconv_block_pruned_forward.4} parent=55 // pred_fallthru
        _
    $region56: #{qconv_block_pruned_forward.4} parent=5 // pred_fallthru
      _
  $region6: #{qconv_block_pruned_forward.4} parent=0 // loop_footer
    %s18 = sadd.s32 1, %s14
  $region7: #{qconv_block_pruned_forward.4} parent=0 // loop_footer_branch
    %13 = sbr.rel target = $region3
  $region8: #{qconv_block_pruned_forward.4} parent=0 // loop_exit
    _

// kernel: qconv_block_pruned_forward.3
$region0: #{qconv_block_pruned_forward.3}
  #allocation0 [shape = 'u32[]', space=smem, size = 0x4, offset = 0x4, fixed_abs, tag = 'smem constant byte address 0x4 - core index']
  #allocation1 [shape = 'u32[144,128]{1,0:T(1,128)}', space=vmem, size = 0x12000, scoped, tag = 'internal scratch']
  #allocation2 [shape = 'bf16[36,640]{1,0:T(8,128)(2,1)}', space=vmem, size = 0xc800, scoped, tag = 'scratch operand']
  %s0 = inlined_call_operand.vmem [shape: bf16[4,1536], index: 0, kind: input, shape index: {}]
  %s1 = inlined_call_operand.vmem [shape: bf16[8,36], index: 1, kind: input, shape index: {}]
  %s2 = inlined_call_operand.vmem [shape: bf16[8,1280], index: 2, kind: output, shape index: {0}]
  %s3 = inlined_call_operand.vmem [shape: f32[2,8,2], index: 3, kind: output, shape index: {1}]
  %4 = xla_tuple %s2, %s3
  %s5 = sld [smem:[#allocation0]]
  $region49: #{qconv_block_pruned_forward.3} parent=0
    _
  %s7 = ssub.s32 1, %s5
  %s8 = scalar_select 0, %s7, %s5
  loop: start=0, step=1, limit=4
  $region2: #{qconv_block_pruned_forward.3} parent=0 // loop_pre_header
    _
  $region3: #{qconv_block_pruned_forward.3} parent=0 // loop_header
    %s10 = sphi 0, %s14
    %p11 = scmp.ge.s32.totalorder %s10, 4
    %s20 = sphi 0, %s22
    %s23 = sphi 0, %s20
    %s24 = sphi 0, %s23
    %s40 = sphi 0, %s24
    %s44 = sphi 0, %s44
    %s46 = sphi 0, %s44
    %s47 = sphi 0, %s46
    %s61 = sphi 0, %s47
    %s67 = sphi 0, %s69
    %s70 = sphi 0, %s67
    %s71 = sphi 0, %s70
    %s87 = sphi 0, %s71
    %s93 = sphi 0, %s95
    %s96 = sphi 0, %s93
    %s97 = sphi 0, %s96
    %s113 = sphi 0, %s97
  $region4: #{qconv_block_pruned_forward.3} parent=0 // loop_header_branch
    %13 = sbr.rel (%p11) target = $region8
  $region5: #{qconv_block_pruned_forward.3} parent=0 // loop_body
    %s15 = ssub.s32 %s10, 1
    %s16 = ssub.s32 %s10, 2
    %s17 = sadd.s32 %s10, 1
    %s18 = ssub.s32 %s10, %s17
    %p19 = scmp.eq.s32.totalorder %s18, 0
    %s21 = sadd.s32 %s20, 1
    %s22 = scalar_select %p19, %s20, %s21
    %p25 = pneg %p19
    %p26 = scmp.eq.s32.totalorder %s10, 1
    %p27 = por %p25, %p26
    %p28 = scmp.ne.s32.totalorder %s20, %s23
    %p29 = scmp.eq.s32.totalorder %s10, 0
    %p30 = por %p28, %p29
    %p31 = scmp.ne.s32.totalorder %s20, %s23
    %p32 = scmp.eq.s32.totalorder %s15, 1
    %p33 = por %p31, %p32
    %p34 = scmp.ne.s32.totalorder %s23, %s24
    %p35 = scmp.eq.s32.totalorder %s15, 0
    %p36 = por %p34, %p35
    %p37 = scmp.ne.s32.totalorder %s23, %s24
    %p38 = scmp.eq.s32.totalorder %s16, 1
    %p39 = por %p37, %p38
    %p41 = scmp.ne.s32.totalorder %s24, %s40
    %p42 = scmp.eq.s32.totalorder %s16, 0
    %p43 = por %p41, %p42
    %s45 = sadd.s32 %s44, 1
    %p48 = scmp.eq.s32.totalorder %s10, 1
    %p49 = scmp.ne.s32.totalorder %s44, %s46
    %p50 = scmp.eq.s32.totalorder %s10, 0
    %p51 = por %p49, %p50
    %p52 = scmp.ne.s32.totalorder %s44, %s46
    %p53 = scmp.eq.s32.totalorder %s15, 1
    %p54 = por %p52, %p53
    %p55 = scmp.ne.s32.totalorder %s46, %s47
    %p56 = scmp.eq.s32.totalorder %s15, 0
    %p57 = por %p55, %p56
    %p58 = scmp.ne.s32.totalorder %s46, %s47
    %p59 = scmp.eq.s32.totalorder %s16, 1
    %p60 = por %p58, %p59
    %p62 = scmp.ne.s32.totalorder %s47, %s61
    %p63 = scmp.eq.s32.totalorder %s16, 0
    %p64 = por %p62, %p63
    %s65 = ssub.s32 %s10, %s17
    %p66 = scmp.eq.s32.totalorder %s65, 0
    %s68 = sadd.s32 %s67, 1
    %s69 = scalar_select %p66, %s67, %s68
    %p72 = pneg %p66
    %p73 = scmp.eq.s32.totalorder %s10, 1
    %p74 = por %p72, %p73
    %p75 = scmp.ne.s32.totalorder %s67, %s70
    %p76 = scmp.eq.s32.totalorder %s10, 0
    %p77 = por %p75, %p76
    %p78 = scmp.ne.s32.totalorder %s67, %s70
    %p79 = scmp.eq.s32.totalorder %s15, 1
    %p80 = por %p78, %p79
    %p81 = scmp.ne.s32.totalorder %s70, %s71
    %p82 = scmp.eq.s32.totalorder %s15, 0
    %p83 = por %p81, %p82
    %p84 = scmp.ne.s32.totalorder %s70, %s71
    %p85 = scmp.eq.s32.totalorder %s16, 1
    %p86 = por %p84, %p85
    %p88 = scmp.ne.s32.totalorder %s71, %s87
    %p89 = scmp.eq.s32.totalorder %s16, 0
    %p90 = por %p88, %p89
    %s91 = ssub.s32 %s10, %s17
    %p92 = scmp.eq.s32.totalorder %s91, 0
    %s94 = sadd.s32 %s93, 1
    %s95 = scalar_select %p92, %s93, %s94
    %p98 = pneg %p92
    %p99 = scmp.eq.s32.totalorder %s10, 1
    %p100 = por %p98, %p99
    %p101 = scmp.ne.s32.totalorder %s93, %s96
    %p102 = scmp.eq.s32.totalorder %s10, 0
    %p103 = por %p101, %p102
    %p104 = scmp.ne.s32.totalorder %s93, %s96
    %p105 = scmp.eq.s32.totalorder %s15, 1
    %p106 = por %p104, %p105
    %p107 = scmp.ne.s32.totalorder %s96, %s97
    %p108 = scmp.eq.s32.totalorder %s15, 0
    %p109 = por %p107, %p108
    %p110 = scmp.ne.s32.totalorder %s96, %s97
    %p111 = scmp.eq.s32.totalorder %s16, 1
    %p112 = por %p110, %p111
    %p114 = scmp.ne.s32.totalorder %s97, %s113
    %p115 = scmp.eq.s32.totalorder %s16, 0
    %p116 = por %p114, %p115
    %p117 = scmp.le.s32.totalorder 1, %s10
    %p118 = scmp.lt.s32.totalorder %s10, 3
    %p119 = pnand %p117, %p118
    %p120 = pneg %p119
    // Predicated region
    $region9: #{qconv_block_pruned_forward.3} parent=5 // pred_check
      _
    $region10: #{qconv_block_pruned_forward.3} parent=5 // pred_check_branch
      %122 = sbr.rel (%p119) target = $region12
    $region11: #{qconv_block_pruned_forward.3} parent=5 // pred_region
      %s123 = ssub.s32 %s10, 1
      // Predicated region
      $region13: #{qconv_block_pruned_forward.3} parent=11 // pred_check
        %p124 = pneg %p57
      $region14: #{qconv_block_pruned_forward.3} parent=11 // pred_check_branch
        %126 = sbr.rel (%p124) target = $region16
      $region15: #{qconv_block_pruned_forward.3} parent=11 // pred_region
        _
      $region16: #{qconv_block_pruned_forward.3} parent=11 // pred_fallthru
        _
    $region12: #{qconv_block_pruned_forward.3} parent=5 // pred_fallthru
      _
    %p127 = scmp.lt.s32.totalorder %s10, 2
    // Predicated region
    $region17: #{qconv_block_pruned_forward.3} parent=5 // pred_check
      %p128 = pneg %p127
    $region18: #{qconv_block_pruned_forward.3} parent=5 // pred_check_branch
      %130 = sbr.rel (%p128) target = $region20
    $region19: #{qconv_block_pruned_forward.3} parent=5 // pred_region
      // Predicated region
      $region21: #{qconv_block_pruned_forward.3} parent=19 // pred_check
        %p131 = pneg %p30
      $region22: #{qconv_block_pruned_forward.3} parent=19 // pred_check_branch
        %133 = sbr.rel (%p131) target = $region24
      $region23: #{qconv_block_pruned_forward.3} parent=19 // pred_region
        %s134 = smul.u32 6, %s10
        %p135 = scmp.lt.s32.totalorder %s134, 11
        %s136 = scalar_select %p135, %s134, 11
        %s137 = smul.addr %s136, 2
        %s138 = scalar_lea.vmem %s0, %s137
        %s139 = smul.u32 6, %s10
      $region24: #{qconv_block_pruned_forward.3} parent=19 // pred_fallthru
        _
    $region20: #{qconv_block_pruned_forward.3} parent=5 // pred_fallthru
      _
    %p140 = scmp.le.s32.totalorder 1, %s10
    %p141 = scmp.lt.s32.totalorder %s10, 3
    %p142 = pnand %p140, %p141
    %p143 = pneg %p142
    // Predicated region
    $region25: #{qconv_block_pruned_forward.3} parent=5 // pred_check
      _
    $region26: #{qconv_block_pruned_forward.3} parent=5 // pred_check_branch
      %145 = sbr.rel (%p142) target = $region28
    $region27: #{qconv_block_pruned_forward.3} parent=5 // pred_region
      %s146 = ssub.s32 %s10, 1
      %s147 = smul.u32 6, %s15
      %p148 = scmp.lt.s32.totalorder %s147, 11
      %s149 = scalar_select %p148, %s147, 11
      %s150 = smul.addr %s149, 2
      %s151 = scalar_lea.vmem %s0, %s150
      %p152 = pneg %p36
      %p153 = pneg %p33
      %p154 = pneg %p57
      %p155 = pneg %p54
      %p156 = pneg %p83
      %p157 = pneg %p80
      %s158 = smul.u32 5, %s15
      %p159 = scmp.lt.s32.totalorder %s158, 9
      %s160 = scalar_select %p159, %s158, 9
      %s161 = smul.addr %s160, 4
      %s162 = scalar_lea.vmem %s2, %s161
      %p163 = pneg %p109
      %p164 = pneg %p106
      %p165 = scmp.lt.s32.totalorder %s15, 1
      %s166 = scalar_select %p165, %s15, 1
      %s167 = smul.addr %s166, 8
      %s168 = scalar_lea.vmem %s3, %s167
      %s169 = smul.u32 6, %s15
      %p170 = scmp.lt.s32.totalorder %s169, 11
      %s171 = scalar_select %p170, %s169, 11
      %s172 = smul.addr %s171, 2
      %s173 = scalar_lea.vmem %s0, %s172
      %s174 = smul.u32 6, %s15
      %s175 = smul.u32 5, %s15
      %p176 = scmp.lt.s32.totalorder %s175, 9
      %s177 = scalar_select %p176, %s175, 9
      %s178 = smul.addr %s177, 4
      %s179 = scalar_lea.vmem %s2, %s178
      %s180 = smul.u32 5, %s15
      %p181 = scmp.lt.s32.totalorder %s15, 1
      %s182 = scalar_select %p181, %s15, 1
      %s183 = smul.addr %s182, 8
      %s184 = scalar_lea.vmem %s3, %s183
      %v186 = vld [vmem:[%s173] sm:$0xff]
      %v187 = vld [vmem:[%s173 + $0x8] sm:$0x3]
      %v190 = vcombine.high %v186, %v186
      %v192 = vunpack.c.l.s4 1983009808
      %v193 = vunpack.c.0.s8 %v192
      %v194 = vlaneseq
      %v195 = vshrl.u32 %v194, 7
      %v196 = vsub.s32 %v193, %v195
      %v197 = vrot.slane %v186, %v196
      %v199 = vunpack.c.l.s4 1983009808
      %v200 = vunpack.c.0.s8 %v199
      %v201 = vlaneseq
      %v202 = vshrl.u32 %v201, 7
      %v203 = vsub.s32 %v200, %v202
      %v204 = vrot.slane %v190, %v203
      %v206 = vunpack.c.l.s4 1983009808
      %v207 = vunpack.c.0.s8 %v206
      %v208 = vlaneseq
      %v209 = vshrl.u32 %v208, 7
      %v210 = vsub.s32 %v207, %v209
      %v211 = vrot.slane %v187, %v210
      %215 = vst [vmem:[#allocation2] sm:$0x33] %v197
      %216 = vst [vmem:[#allocation2 + $0x8] sm:$0x33] %v204
      %217 = vst [vmem:[#allocation2 + $0x10] sm:$0x3] %v211
      %v218 = vld [vmem:[%s173] sm:$0xff]
      %v219 = vld [vmem:[%s173 + $0x8] sm:$0xf]
      %v222 = vcombine.low %v218, %v218
      %v224 = vunpack.c.l.s4 1983009808
      %v225 = vunpack.c.0.s8 %v224
      %v226 = vlaneseq
      %v227 = vshrl.u32 %v226, 7
      %v228 = vsub.s32 %v225, %v227
      %v229 = vrot.slane %v222, %v228
      %v231 = vunpack.c.l.s4 1983009808
      %v232 = vunpack.c.0.s8 %v231
      %v233 = vlaneseq
      %v234 = vshrl.u32 %v233, 7
      %v235 = vsub.s32 %v232, %v234
      %v236 = vrot.slane %v218, %v235
      %v237 = vcombine.low %v219, %v219
      %v239 = vunpack.c.l.s4 1983009808
      %v240 = vunpack.c.0.s8 %v239
      %v241 = vlaneseq
      %v242 = vshrl.u32 %v241, 7
      %v243 = vsub.s32 %v240, %v242
      %v244 = vrot.slane %v237, %v243
      %245 = vrot.lane.b32.xlu0 %v229, 127
      %v246 = vpop.permute.xlu0 %245
      %247 = vrot.lane.b32.xlu0 %v236, 127
      %v248 = vpop.permute.xlu0 %247
      %249 = vrot.lane.b32.xlu0 %v244, 127
      %v250 = vpop.permute.xlu0 %249
      %v251 = vrot.slane %v246, 4
      %v252 = vrot.slane %v248, 4
      %v253 = vrot.slane %v250, 4
      %vm254 = vcmask 1043456
      %v255 = vsel %vm254, %v251, %v252
      %vm256 = vcmask 1039360
      %v257 = vsel %vm256, %v246, %v255
      %v258 = vsel %vm254, %v252, %v253
      %v259 = vsel %vm256, %v248, %v258
      %v260 = vsel %vm256, %v250, %v253
      %264 = vst [vmem:[#allocation2] sm:$0xcc] %v257
      %265 = vst [vmem:[#allocation2 + $0x8] sm:$0xcc] %v259
      %266 = vst [vmem:[#allocation2 + $0x10] sm:$0xc] %v260
      %v267 = vld [vmem:[%s173] sm:$0xff]
      %v268 = vld [vmem:[%s173 + $0x8] sm:$0xf]
      %v271 = vcombine.high %v267, %v267
      %v273 = vunpack.c.l.s4 1983009808
      %v274 = vunpack.c.0.s8 %v273
      %v275 = vlaneseq
      %v276 = vshrl.u32 %v275, 7
      %v277 = vsub.s32 %v274, %v276
      %v278 = vrot.slane %v267, %v277
      %v280 = vunpack.c.l.s4 1983009808
      %v281 = vunpack.c.0.s8 %v280
      %v282 = vlaneseq
      %v283 = vshrl.u32 %v282, 7
      %v284 = vsub.s32 %v281, %v283
      %v285 = vrot.slane %v271, %v284
      %v287 = vunpack.c.l.s4 1983009808
      %v288 = vunpack.c.0.s8 %v287
      %v289 = vlaneseq
      %v290 = vshrl.u32 %v289, 7
      %v291 = vsub.s32 %v288, %v290
      %v292 = vrot.slane %v268, %v291
      %293 = vrot.lane.b32.xlu0 %v278, 126
      %v294 = vpop.permute.xlu0 %293
      %295 = vrot.lane.b32.xlu0 %v285, 126
      %v296 = vpop.permute.xlu0 %295
      %297 = vrot.lane.b32.xlu0 %v292, 126
      %v298 = vpop.permute.xlu0 %297
      %v299 = vrot.slane %v294, 4
      %v300 = vrot.slane %v296, 4
      %v301 = vrot.slane %v298, 4
      %v302 = vsel %vm254, %v299, %v300
      %vm303 = vcmask 1031168
      %v304 = vsel %vm303, %v294, %v302
      %v305 = vsel %vm254, %v300, %v301
      %v306 = vsel %vm303, %v296, %v305
      %v307 = vsel %vm303, %v298, %v301
      %311 = vst [vmem:[#allocation2 + $0x14] sm:$0x33] %v304
      %312 = vst [vmem:[#allocation2 + $0x1c] sm:$0x33] %v306
      %313 = vst [vmem:[#allocation2 + $0x24] sm:$0x3] %v307
      %v314 = vld [vmem:[%s173] sm:$0xff]
      %v315 = vld [vmem:[%s173 + $0x8] sm:$0xf]
      %v318 = vcombine.low %v314, %v314
      %v320 = vunpack.c.l.s4 1983009808
      %v321 = vunpack.c.0.s8 %v320
      %v322 = vlaneseq
      %v323 = vshrl.u32 %v322, 7
      %v324 = vsub.s32 %v321, %v323
      %v325 = vrot.slane %v318, %v324
      %v327 = vunpack.c.l.s4 1983009808
      %v328 = vunpack.c.0.s8 %v327
      %v329 = vlaneseq
      %v330 = vshrl.u32 %v329, 7
      %v331 = vsub.s32 %v328, %v330
      %v332 = vrot.slane %v314, %v331
      %v333 = vcombine.low %v315, %v315
      %v335 = vunpack.c.l.s4 1983009808
      %v336 = vunpack.c.0.s8 %v335
      %v337 = vlaneseq
      %v338 = vshrl.u32 %v337, 7
      %v339 = vsub.s32 %v336, %v338
      %v340 = vrot.slane %v333, %v339
      %341 = vrot.lane.b32.xlu0 %v325, 108
      %v342 = vpop.permute.xlu0 %341
      %343 = vrot.lane.b32.xlu0 %v332, 108
      %v344 = vpop.permute.xlu0 %343
      %345 = vrot.lane.b32.xlu0 %v340, 108
      %v346 = vpop.permute.xlu0 %345
      %v347 = vrot.slane %v342, 4
      %v348 = vrot.slane %v344, 4
      %v349 = vrot.slane %v346, 4
      %v350 = vsel %vm254, %v347, %v348
      %vm351 = vcmask 883712
      %v352 = vsel %vm351, %v342, %v350
      %v353 = vsel %vm254, %v348, %v349
      %v354 = vsel %vm351, %v344, %v353
      %v355 = vsel %vm351, %v346, %v349
      %359 = vst [vmem:[#allocation2 + $0x14] sm:$0xcc] %v352
      %360 = vst [vmem:[#allocation2 + $0x1c] sm:$0xcc] %v354
      %361 = vst [vmem:[#allocation2 + $0x24] sm:$0xc] %v355
      %v362 = vld [vmem:[%s173] sm:$0xff]
      %v363 = vld [vmem:[%s173 + $0x8] sm:$0xf]
      %v366 = vcombine.high %v362, %v362
      %v368 = vunpack.c.l.s4 1983009808
      %v369 = vunpack.c.0.s8 %v368
      %v370 = vlaneseq
      %v371 = vshrl.u32 %v370, 7
      %v372 = vsub.s32 %v369, %v371
      %v373 = vrot.slane %v362, %v372
      %v375 = vunpack.c.l.s4 1983009808
      %v376 = vunpack.c.0.s8 %v375
      %v377 = vlaneseq
      %v378 = vshrl.u32 %v377, 7
      %v379 = vsub.s32 %v376, %v378
      %v380 = vrot.slane %v366, %v379
      %v382 = vunpack.c.l.s4 1983009808
      %v383 = vunpack.c.0.s8 %v382
      %v384 = vlaneseq
      %v385 = vshrl.u32 %v384, 7
      %v386 = vsub.s32 %v383, %v385
      %v387 = vrot.slane %v363, %v386
      %388 = vrot.lane.b32.xlu0 %v373, 107
      %v389 = vpop.permute.xlu0 %388
      %390 = vrot.lane.b32.xlu0 %v380, 107
      %v391 = vpop.permute.xlu0 %390
      %392 = vrot.lane.b32.xlu0 %v387, 107
      %v393 = vpop.permute.xlu0 %392
      %v394 = vrot.slane %v389, 4
      %v395 = vrot.slane %v391, 4
      %v396 = vrot.slane %v393, 4
      %v397 = vsel %vm254, %v394, %v395
      %vm398 = vcmask 875520
      %v399 = vsel %vm398, %v389, %v397
      %v400 = vsel %vm254, %v395, %v396
      %v401 = vsel %vm398, %v391, %v400
      %v402 = vsel %vm398, %v393, %v396
      %406 = vst [vmem:[#allocation2 + $0x28] sm:$0x33] %v399
      %407 = vst [vmem:[#allocation2 + $0x30] sm:$0x33] %v401
      %408 = vst [vmem:[#allocation2 + $0x38] sm:$0x3] %v402
      %v409 = vld [vmem:[%s173] sm:$0xff]
      %v410 = vld [vmem:[%s173 + $0x8] sm:$0xf]
      %v413 = vcombine.low %v409, %v409
      %v415 = vunpack.c.l.s4 1983009808
      %v416 = vunpack.c.0.s8 %v415
      %v417 = vlaneseq
      %v418 = vshrl.u32 %v417, 7
      %v419 = vsub.s32 %v416, %v418
      %v420 = vrot.slane %v413, %v419
      %v422 = vunpack.c.l.s4 1983009808
      %v423 = vunpack.c.0.s8 %v422
      %v424 = vlaneseq
      %v425 = vshrl.u32 %v424, 7
      %v426 = vsub.s32 %v423, %v425
      %v427 = vrot.slane %v409, %v426
      %v428 = vcombine.low %v410, %v410
      %v430 = vunpack.c.l.s4 1983009808
      %v431 = vunpack.c.0.s8 %v430
      %v432 = vlaneseq
      %v433 = vshrl.u32 %v432, 7
      %v434 = vsub.s32 %v431, %v433
      %v435 = vrot.slane %v428, %v434
      %436 = vrot.lane.b32.xlu0 %v420, 106
      %v437 = vpop.permute.xlu0 %436
      %438 = vrot.lane.b32.xlu0 %v427, 106
      %v439 = vpop.permute.xlu0 %438
      %440 = vrot.lane.b32.xlu0 %v435, 106
      %v441 = vpop.permute.xlu0 %440
      %v442 = vrot.slane %v437, 4
      %v443 = vrot.slane %v439, 4
      %v444 = vrot.slane %v441, 4
      %v445 = vsel %vm254, %v442, %v443
      %vm446 = vcmask 867328
      %v447 = vsel %vm446, %v437, %v445
      %v448 = vsel %vm254, %v443, %v444
      %v449 = vsel %vm446, %v439, %v448
      %v450 = vsel %vm446, %v441, %v444
      %454 = vst [vmem:[#allocation2 + $0x28] sm:$0xcc] %v447
      %455 = vst [vmem:[#allocation2 + $0x30] sm:$0xcc] %v449
      %456 = vst [vmem:[#allocation2 + $0x38] sm:$0xc] %v450
      %v457 = vld [vmem:[%s173] sm:$0xff]
      %v458 = vld [vmem:[%s173 + $0x8] sm:$0xf]
      %v461 = vcombine.high %v457, %v457
      %v463 = vunpack.c.l.s4 1983009808
      %v464 = vunpack.c.0.s8 %v463
      %v465 = vlaneseq
      %v466 = vshrl.u32 %v465, 7
      %v467 = vsub.s32 %v464, %v466
      %v468 = vrot.slane %v457, %v467
      %v470 = vunpack.c.l.s4 1983009808
      %v471 = vunpack.c.0.s8 %v470
      %v472 = vlaneseq
      %v473 = vshrl.u32 %v472, 7
      %v474 = vsub.s32 %v471, %v473
      %v475 = vrot.slane %v461, %v474
      %v477 = vunpack.c.l.s4 1983009808
      %v478 = vunpack.c.0.s8 %v477
      %v479 = vlaneseq
      %v480 = vshrl.u32 %v479, 7
      %v481 = vsub.s32 %v478, %v480
      %v482 = vrot.slane %v458, %v481
      %483 = vrot.lane.b32.xlu0 %v468, 88
      %v484 = vpop.permute.xlu0 %483
      %485 = vrot.lane.b32.xlu0 %v475, 88
      %v486 = vpop.permute.xlu0 %485
      %487 = vrot.lane.b32.xlu0 %v482, 88
      %v488 = vpop.permute.xlu0 %487
      %v489 = vrot.slane %v484, 4
      %v490 = vrot.slane %v486, 4
      %v491 = vrot.slane %v488, 4
      %v492 = vsel %vm254, %v489, %v490
      %vm493 = vcmask 719872
      %v494 = vsel %vm493, %v484, %v492
      %v495 = vsel %vm254, %v490, %v491
      %v496 = vsel %vm493, %v486, %v495
      %v497 = vsel %vm493, %v488, %v491
      %501 = vst [vmem:[#allocation2 + $0x3c] sm:$0x33] %v494
      %502 = vst [vmem:[#allocation2 + $0x44] sm:$0x33] %v496
      %503 = vst [vmem:[#allocation2 + $0x4c] sm:$0x3] %v497
      %v504 = vld [vmem:[%s173] sm:$0xff]
      %v505 = vld [vmem:[%s173 + $0x8] sm:$0xf]
      %v508 = vcombine.low %v504, %v504
      %v510 = vunpack.c.l.s4 1983009808
      %v511 = vunpack.c.0.s8 %v510
      %v512 = vlaneseq
      %v513 = vshrl.u32 %v512, 7
      %v514 = vsub.s32 %v511, %v513
      %v515 = vrot.slane %v508, %v514
      %v517 = vunpack.c.l.s4 1983009808
      %v518 = vunpack.c.0.s8 %v517
      %v519 = vlaneseq
      %v520 = vshrl.u32 %v519, 7
      %v521 = vsub.s32 %v518, %v520
      %v522 = vrot.slane %v504, %v521
      %v523 = vcombine.low %v505, %v505
      %v525 = vunpack.c.l.s4 1983009808
      %v526 = vunpack.c.0.s8 %v525
      %v527 = vlaneseq
      %v528 = vshrl.u32 %v527, 7
      %v529 = vsub.s32 %v526, %v528
      %v530 = vrot.slane %v523, %v529
      %531 = vrot.lane.b32.xlu0 %v515, 87
      %v532 = vpop.permute.xlu0 %531
      %533 = vrot.lane.b32.xlu0 %v522, 87
      %v534 = vpop.permute.xlu0 %533
      %535 = vrot.lane.b32.xlu0 %v530, 87
      %v536 = vpop.permute.xlu0 %535
      %v537 = vrot.slane %v532, 4
      %v538 = vrot.slane %v534, 4
      %v539 = vrot.slane %v536, 4
      %v540 = vsel %vm254, %v537, %v538
      %vm541 = vcmask 711680
      %v542 = vsel %vm541, %v532, %v540
      %v543 = vsel %vm254, %v538, %v539
      %v544 = vsel %vm541, %v534, %v543
      %v545 = vsel %vm541, %v536, %v539
      %549 = vst [vmem:[#allocation2 + $0x3c] sm:$0xcc] %v542
      %550 = vst [vmem:[#allocation2 + $0x44] sm:$0xcc] %v544
      %551 = vst [vmem:[#allocation2 + $0x4c] sm:$0xc] %v545
      %v552 = vld [vmem:[%s173] sm:$0xff]
      %v553 = vld [vmem:[%s173 + $0x8] sm:$0xf]
      %v556 = vcombine.high %v552, %v552
      %v558 = vunpack.c.l.s4 1983009808
      %v559 = vunpack.c.0.s8 %v558
      %v560 = vlaneseq
      %v561 = vshrl.u32 %v560, 7
      %v562 = vsub.s32 %v559, %v561
      %v563 = vrot.slane %v552, %v562
      %v565 = vunpack.c.l.s4 1983009808
      %v566 = vunpack.c.0.s8 %v565
      %v567 = vlaneseq
      %v568 = vshrl.u32 %v567, 7
      %v569 = vsub.s32 %v566, %v568
      %v570 = vrot.slane %v556, %v569
      %v572 = vunpack.c.l.s4 1983009808
      %v573 = vunpack.c.0.s8 %v572
      %v574 = vlaneseq
      %v575 = vshrl.u32 %v574, 7
      %v576 = vsub.s32 %v573, %v575
      %v577 = vrot.slane %v553, %v576
      %578 = vrot.lane.b32.xlu0 %v563, 86
      %v579 = vpop.permute.xlu0 %578
      %580 = vrot.lane.b32.xlu0 %v570, 86
      %v581 = vpop.permute.xlu0 %580
      %582 = vrot.lane.b32.xlu0 %v577, 86
      %v583 = vpop.permute.xlu0 %582
      %v584 = vrot.slane %v579, 4
      %v585 = vrot.slane %v581, 4
      %v586 = vrot.slane %v583, 4
      %v587 = vsel %vm254, %v584, %v585
      %vm588 = vcmask 703488
      %v589 = vsel %vm588, %v579, %v587
      %v590 = vsel %vm254, %v585, %v586
      %v591 = vsel %vm588, %v581, %v590
      %v592 = vsel %vm588, %v583, %v586
      %596 = vst [vmem:[#allocation2 + $0x50] sm:$0x33] %v589
      %597 = vst [vmem:[#allocation2 + $0x58] sm:$0x33] %v591
      %598 = vst [vmem:[#allocation2 + $0x60] sm:$0x3] %v592
      %v599 = vld [vmem:[%s1] sm:$0xf]
      %v600 = vld [vmem:[#allocation2] sm:$0xff]
      %v601 = vld [vmem:[#allocation2 + $0x8] sm:$0xff]
      %v602 = vld [vmem:[#allocation2 + $0x10] sm:$0xf]
      %v603 = vld [vmem:[#allocation2 + $0x14] sm:$0xff]
      %v604 = vld [vmem:[#allocation2 + $0x1c] sm:$0xff]
      %v605 = vld [vmem:[#allocation2 + $0x24] sm:$0xf]
      %v606 = vld [vmem:[#allocation2 + $0x28] sm:$0xff]
      %v607 = vld [vmem:[#allocation2 + $0x30] sm:$0xff]
      %v608 = vld [vmem:[#allocation2 + $0x38] sm:$0xf]
      %v609 = vld [vmem:[#allocation2 + $0x3c] sm:$0xff]
      %v610 = vld [vmem:[#allocation2 + $0x44] sm:$0xff]
      %v611 = vld [vmem:[#allocation2 + $0x4c] sm:$0xf]
      %v612 = vld [vmem:[#allocation2 + $0x50] sm:$0x33]
      %v613 = vld [vmem:[#allocation2 + $0x58] sm:$0x33]
      %v614 = vld [vmem:[#allocation2 + $0x60] sm:$0x3]
      %v630 = vunpack.c.l.b16 %v600
      %v631 = vunpack.c.h.b16 %v600
      %v632 = vunpack.c.l.b16 %v601
      %v633 = vunpack.c.h.b16 %v601
      %v634 = vunpack.c.l.b16 %v602
      %v635 = vunpack.c.l.b16 %v603
      %v636 = vunpack.c.h.b16 %v603
      %v637 = vunpack.c.l.b16 %v604
      %v638 = vunpack.c.h.b16 %v604
      %v639 = vunpack.c.l.b16 %v605
      %v640 = vunpack.c.l.b16 %v606
      %v641 = vunpack.c.h.b16 %v606
      %v642 = vunpack.c.l.b16 %v607
      %v643 = vunpack.c.h.b16 %v607
      %v644 = vunpack.c.l.b16 %v608
      %v645 = vunpack.c.l.b16 %v609
      %v646 = vunpack.c.h.b16 %v609
      %v647 = vunpack.c.l.b16 %v610
      %v648 = vunpack.c.h.b16 %v610
      %v649 = vunpack.c.l.b16 %v611
      %v650 = vunpack.c.l.b16 %v612
      %v651 = vunpack.c.h.b16 %v612
      %v652 = vunpack.c.l.b16 %v613
      %v653 = vunpack.c.h.b16 %v613
      %v654 = vunpack.c.l.b16 %v614
      %v655 = vpack.c.b16 %v635, %v630
      %v656 = vpack.c.b16 %v636, %v631
      %v657 = vpack.c.b16 %v637, %v632
      %v658 = vpack.c.b16 %v638, %v633
      %v659 = vpack.c.b16 %v639, %v634
      %v660 = vpack.c.b16 %v645, %v640
      %v661 = vpack.c.b16 %v646, %v641
      %v662 = vpack.c.b16 %v647, %v642
      %v663 = vpack.c.b16 %v648, %v643
      %v664 = vpack.c.b16 %v649, %v644
      %v665 = vpack.c.b16 %v650, %v650
      %v666 = vpack.c.b16 %v651, %v651
      %v667 = vpack.c.b16 %v652, %v652
      %v668 = vpack.c.b16 %v653, %v653
      %v669 = vpack.c.b16 %v654, %v654
      %vm680 = vcmask 293888
      %v682 = vsel %vm680, %v599, 0
      %vm684 = vcmask 1041408
      %v686 = vsel %vm684, %v665, 0
      %v689 = vsel %vm684, %v666, 0
      %v692 = vsel %vm684, %v667, 0
      %v695 = vsel %vm684, %v668, 0
      %v698 = vsel %vm684, %v669, 0
      %700 = vmatprep.subr.bf16.mxu0 %v656
      %701 = vmatpush1.bf16.msra.mxu0 %v655
      %702 = vmatprep.subr.bf16.mxu0 %v661
      %703 = vmatpush1.bf16.msra.mxu0 %v660
      %704 = vmatprep.subr.bf16.mxu0 %v689
      %705 = vmatpush1.bf16.msra.mxu0 %v686
      %706 = vmatprep.subr.bf16.mxu0 0
      %707 = vmatpush1.bf16.msra.mxu0 0
      %708 = vmatprep.subr.bf16.mxu0 0
      %709 = vmatpush1.bf16.msra.mxu0 0
      %710 = vmatprep.subr.bf16.mxu0 0
      %711 = vmatpush1.bf16.msra.mxu0 0
      %712 = vmatprep.subr.bf16.mxu0 0
      %713 = vmatpush1.bf16.msra.mxu0 0
      %714 = vmatprep.subr.bf16.mxu0 0
      %715 = vmatpush1.bf16.msra.mxu0 0
      %716 = vmatprep.subr.bf16.mxu0 0
      %717 = vmatpush1.bf16.msra.mxu0 0
      %718 = vmatprep.subr.bf16.mxu0 0
      %719 = vmatpush1.bf16.msra.mxu0 0
      %720 = vmatprep.subr.bf16.mxu0 0
      %721 = vmatpush1.bf16.msra.mxu0 0
      %722 = vmatprep.subr.bf16.mxu0 0
      %723 = vmatpush1.bf16.msra.mxu0 0
      %724 = vmatprep.subr.bf16.mxu0 0
      %725 = vmatpush1.bf16.msra.mxu0 0
      %726 = vmatprep.subr.bf16.mxu0 0
      %727 = vmatpush1.bf16.msra.mxu0 0
      %728 = vmatprep.subr.bf16.mxu0 0
      %729 = vmatpush1.bf16.msra.mxu0 0
      %730 = vmatprep.subr.bf16.mxu0 0
      %731 = vmatpush1.bf16.msra.mxu0 0
      %732 = vmatprep.mubr.bf16.mxu0 0
      %733 = vmatmul.mubr.bf16.gmra.mrb[0].mxu0 %v682
      %v734 = vpop.f32.mrb[0].mxu0
      %v735 = vadd.f32 0.0, %v734
      %v736 = vpop.f32.mrb[0].mxu0
      %v737 = vadd.f32 0.0, %v736
      %v738 = vpop.f32.mrb[0].mxu0
      %v739 = vpop.f32.mrb[0].mxu0
      %740 = vdwg.mxu0
      %741 = vmatprep.subr.bf16.mxu0 %v658
      %742 = vmatpush1.bf16.msra.mxu0 %v657
      %743 = vmatprep.subr.bf16.mxu0 %v663
      %744 = vmatpush1.bf16.msra.mxu0 %v662
      %745 = vmatprep.subr.bf16.mxu0 %v695
      %746 = vmatpush1.bf16.msra.mxu0 %v692
      %747 = vmatprep.subr.bf16.mxu0 0
      %748 = vmatpush1.bf16.msra.mxu0 0
      %749 = vmatprep.subr.bf16.mxu0 0
      %750 = vmatpush1.bf16.msra.mxu0 0
      %751 = vmatprep.subr.bf16.mxu0 0
      %752 = vmatpush1.bf16.msra.mxu0 0
      %753 = vmatprep.subr.bf16.mxu0 0
      %754 = vmatpush1.bf16.msra.mxu0 0
      %755 = vmatprep.subr.bf16.mxu0 0
      %756 = vmatpush1.bf16.msra.mxu0 0
      %757 = vmatprep.subr.bf16.mxu0 0
      %758 = vmatpush1.bf16.msra.mxu0 0
      %759 = vmatprep.subr.bf16.mxu0 0
      %760 = vmatpush1.bf16.msra.mxu0 0
      %761 = vmatprep.subr.bf16.mxu0 0
      %762 = vmatpush1.bf16.msra.mxu0 0
      %763 = vmatprep.subr.bf16.mxu0 0
      %764 = vmatpush1.bf16.msra.mxu0 0
      %765 = vmatprep.subr.bf16.mxu0 0
      %766 = vmatpush1.bf16.msra.mxu0 0
      %767 = vmatprep.subr.bf16.mxu0 0
      %768 = vmatpush1.bf16.msra.mxu0 0
      %769 = vmatprep.subr.bf16.mxu0 0
      %770 = vmatpush1.bf16.msra.mxu0 0
      %771 = vmatprep.subr.bf16.mxu0 0
      %772 = vmatpush1.bf16.msra.mxu0 0
      %773 = vmatprep.mubr.bf16.mxu0 0
      %774 = vmatmul.mubr.bf16.gmra.mrb[0].mxu0 %v682
      %v775 = vpop.f32.mrb[0].mxu0
      %v776 = vadd.f32 0.0, %v775
      %v777 = vpop.f32.mrb[0].mxu0
      %v778 = vadd.f32 0.0, %v777
      %v779 = vpop.f32.mrb[0].mxu0
      %v780 = vpop.f32.mrb[0].mxu0
      %781 = vdwg.mxu0
      %782 = vmatprep.subr.bf16.mxu0 0
      %783 = vmatpush1.bf16.msra.mxu0 %v659
      %784 = vmatprep.subr.bf16.mxu0 0
      %785 = vmatpush1.bf16.msra.mxu0 %v664
      %786 = vmatprep.subr.bf16.mxu0 0
      %787 = vmatpush1.bf16.msra.mxu0 %v698
      %788 = vmatprep.subr.bf16.mxu0 0
      %789 = vmatpush1.bf16.msra.mxu0 0
      %790 = vmatprep.subr.bf16.mxu0 0
      %791 = vmatpush1.bf16.msra.mxu0 0
      %792 = vmatprep.subr.bf16.mxu0 0
      %793 = vmatpush1.bf16.msra.mxu0 0
      %794 = vmatprep.subr.bf16.mxu0 0
      %795 = vmatpush1.bf16.msra.mxu0 0
      %796 = vmatprep.subr.bf16.mxu0 0
      %797 = vmatpush1.bf16.msra.mxu0 0
      %798 = vmatprep.subr.bf16.mxu0 0
      %799 = vmatpush1.bf16.msra.mxu0 0
      %800 = vmatprep.subr.bf16.mxu0 0
      %801 = vmatpush1.bf16.msra.mxu0 0
      %802 = vmatprep.subr.bf16.mxu0 0
      %803 = vmatpush1.bf16.msra.mxu0 0
      %804 = vmatprep.subr.bf16.mxu0 0
      %805 = vmatpush1.bf16.msra.mxu0 0
      %806 = vmatprep.subr.bf16.mxu0 0
      %807 = vmatpush1.bf16.msra.mxu0 0
      %808 = vmatprep.subr.bf16.mxu0 0
      %809 = vmatpush1.bf16.msra.mxu0 0
      %810 = vmatprep.subr.bf16.mxu0 0
      %811 = vmatpush1.bf16.msra.mxu0 0
      %812 = vmatprep.subr.bf16.mxu0 0
      %813 = vmatpush1.bf16.msra.mxu0 0
      %814 = vmatprep.mubr.bf16.mxu0 0
      %815 = vmatmul.mubr.bf16.gmra.mrb[0].mxu0 %v682
      %v816 = vpop.f32.mrb[0].mxu0
      %v817 = vadd.f32 0.0, %v816
      %v818 = vpop.f32.mrb[0].mxu0
      %v819 = vpop.f32.mrb[0].mxu0
      %v820 = vpop.f32.mrb[0].mxu0
      %821 = vdwg.mxu0
      %v822 = vpack.c.bf16 %v735, %v735
      %v823 = vpack.c.bf16 %v737, %v737
      %v824 = vpack.c.bf16 %v776, %v776
      %v825 = vpack.c.bf16 %v778, %v778
      %v826 = vpack.c.bf16 %v817, %v817
      %v832 = vunpack.c.l.b16 %v822
      %v833 = vunpack.c.l.b16 %v823
      %v834 = vunpack.c.l.b16 %v824
      %v835 = vunpack.c.l.b16 %v825
      %v836 = vunpack.c.l.b16 %v826
      %v837 = vpack.c.b16 %v833, %v832
      %v838 = vpack.c.b16 %v835, %v834
      %v839 = vpack.c.b16 %v836, %v836
      %843 = vst [vmem:[%s179] sm:$0xff] %v837
      %844 = vst [vmem:[%s179 + $0x8] sm:$0xff] %v838
      %845 = vst [vmem:[%s179 + $0x10] sm:$0xf] %v839
      %v846 = vunpack.c.l.bf16 %v822
      %v847 = vunpack.c.l.bf16 %v823
      %v848 = vunpack.c.l.bf16 %v824
      %v849 = vunpack.c.l.bf16 %v825
      %v850 = vunpack.c.l.bf16 %v826
      %v851 = vadd.f32 %v846, %v847
      %v852 = vadd.f32 %v851, %v848
      %v853 = vadd.f32 %v852, %v849
      %v854 = vadd.f32 %v853, %v850
      %855 = vadd.xlane.f32.xlu0 %v854
      %v856 = vpop.xlane.xlu0 %855
      %v857 = vmul.f32 %v846, %v846
      %v858 = vmul.f32 %v847, %v847
      %v859 = vmul.f32 %v848, %v848
      %v860 = vmul.f32 %v849, %v849
      %v861 = vmul.f32 %v850, %v850
      %v862 = vadd.f32 %v857, %v858
      %v863 = vadd.f32 %v862, %v859
      %v864 = vadd.f32 %v863, %v860
      %v865 = vadd.f32 %v864, %v861
      %866 = vadd.xlane.f32.xlu0 %v865
      %v867 = vpop.xlane.xlu0 %866
      %vm868 = vcmask 7168
      %v869 = vsel %vm868, %v856, %v867
      %vm870 = vcmask 15360
      %871 = vst.msk [vmem:[%s184] sm:$0xff] %vm870, %v869
      %s872 = smul.u32 5, %s15
      %p873 = scmp.lt.s32.totalorder %s872, 9
      %s874 = scalar_select %p873, %s872, 9
      %s875 = smul.addr %s874, 4
      %s876 = scalar_lea.vmem %s2, %s875
      %p877 = scmp.lt.s32.totalorder %s15, 1
      %s878 = scalar_select %p877, %s15, 1
      %s879 = smul.addr %s878, 8
      %s880 = scalar_lea.vmem %s3, %s879
      // Predicated region
      $region29: #{qconv_block_pruned_forward.3} parent=27 // pred_check
        %p881 = pneg %p80
      $region30: #{qconv_block_pruned_forward.3} parent=27 // pred_check_branch
        %883 = sbr.rel (%p881) target = $region32
      $region31: #{qconv_block_pruned_forward.3} parent=27 // pred_region
        %s884 = smul.u32 5, %s15
      $region32: #{qconv_block_pruned_forward.3} parent=27 // pred_fallthru
        _
      // Predicated region
      $region33: #{qconv_block_pruned_forward.3} parent=27 // pred_check
        %p885 = pneg %p106
      $region34: #{qconv_block_pruned_forward.3} parent=27 // pred_check_branch
        %887 = sbr.rel (%p885) target = $region36
      $region35: #{qconv_block_pruned_forward.3} parent=27 // pred_region
        _
      $region36: #{qconv_block_pruned_forward.3} parent=27 // pred_fallthru
        _
    $region28: #{qconv_block_pruned_forward.3} parent=5 // pred_fallthru
      _
    %p888 = scmp.le.s32.totalorder 2, %s10
    // Predicated region
    $region37: #{qconv_block_pruned_forward.3} parent=5 // pred_check
      %p889 = pneg %p888
    $region38: #{qconv_block_pruned_forward.3} parent=5 // pred_check_branch
      %891 = sbr.rel (%p889) target = $region40
    $region39: #{qconv_block_pruned_forward.3} parent=5 // pred_region
      %s892 = ssub.s32 %s10, 2
      // Predicated region
      $region41: #{qconv_block_pruned_forward.3} parent=39 // pred_check
        %p893 = pneg %p86
      $region42: #{qconv_block_pruned_forward.3} parent=39 // pred_check_branch
        %895 = sbr.rel (%p893) target = $region44
      $region43: #{qconv_block_pruned_forward.3} parent=39 // pred_region
        %s896 = smul.u32 5, %s16
        %p897 = scmp.lt.s32.totalorder %s896, 9
        %s898 = scalar_select %p897, %s896, 9
        %s899 = smul.addr %s898, 4
        %s900 = scalar_lea.vmem %s2, %s899
      $region44: #{qconv_block_pruned_forward.3} parent=39 // pred_fallthru
        _
      // Predicated region
      $region45: #{qconv_block_pruned_forward.3} parent=39 // pred_check
        %p901 = pneg %p112
      $region46: #{qconv_block_pruned_forward.3} parent=39 // pred_check_branch
        %903 = sbr.rel (%p901) target = $region48
      $region47: #{qconv_block_pruned_forward.3} parent=39 // pred_region
        %p904 = scmp.lt.s32.totalorder %s16, 1
        %s905 = scalar_select %p904, %s16, 1
        %s906 = smul.addr %s905, 8
        %s907 = scalar_lea.vmem %s3, %s906
      $region48: #{qconv_block_pruned_forward.3} parent=39 // pred_fallthru
        _
    $region40: #{qconv_block_pruned_forward.3} parent=5 // pred_fallthru
      _
  $region6: #{qconv_block_pruned_forward.3} parent=0 // loop_footer
    %s14 = sadd.s32 1, %s10
  $region7: #{qconv_block_pruned_forward.3} parent=0 // loop_footer_branch
    %9 = sbr.rel target = $region3
  $region8: #{qconv_block_pruned_forward.3} parent=0 // loop_exit
    _

</llo_original>
